<compile_context>
chip_gen: v5e
topology: v5e:2x2
jax: 0.10.0
libtpu: 0.0.40
codegen_flags: <defaults>
</compile_context>

<pallas_src>
import functools

import jax
import jax.numpy as jnp
from jax.experimental import pallas as pl
from jax.experimental.pallas import tpu as pltpu


# ------------------------------ fused kernel -------------------------------- #

def fftnet_fused_kernel(x_ref, h_ref, wx0_ref, wxl_ref, wxr_ref, whl_ref,
                        whr_ref, b_ref, wo_ref, bo_ref, w_out_ref, b_out_ref,
                        o_ref, *, shifts, compute_dtype):
    """Whole FFTNet stack for one batch element, activation resident in VMEM.

    Layout is channels-on-sublane / time-on-lane (C, T).  Each layer computes
        z   = Wxl@act + Wxr@roll(act,-s) + Whl@h + Whr@roll(h,-s) + b
        act = relu(Wo @ relu(z) + bo)
    with `roll` a lane rotation (XLU) instead of a misaligned slice.  The h
    block is advanced by the same roll so its alignment matches PyTorch's
    `h[:, :, -x.size(-1):]` at every layer.  Valid data lives in columns
    [0, T - sum(shifts)); the wrapper crops the rest.
    """
    f32 = jnp.float32
    T = x_ref.shape[-1]

    x = x_ref[...]                                    # (1, T)  f32
    h_cur = h_ref[...].astype(compute_dtype)          # (Ch, T) aligned with act

    act = None
    for i, s in enumerate(shifts):
        r = (T - s) % T                               # roll(-s): col t <- col t+s
        h_shift = pltpu.roll(h_cur, shift=r, axis=1)  # XLU, overlaps with MXU

        if i == 0:
            # in_channels == 1: x contribution is a broadcast scale (VPU, f32).
            wx0 = wx0_ref[...]                        # (C, 2) = [wxl | wxr]
            x_shift = pltpu.roll(x, shift=r, axis=1)
            z = wx0[:, 0:1] * x + wx0[:, 1:2] * x_shift
        else:
            a = act.astype(compute_dtype)
            a_shift = pltpu.roll(a, shift=r, axis=1)
            z = jnp.dot(wxl_ref[i - 1], a, preferred_element_type=f32)
            z = z + jnp.dot(wxr_ref[i - 1], a_shift, preferred_element_type=f32)

        z = z + jnp.dot(whl_ref[i], h_cur, preferred_element_type=f32)
        z = z + jnp.dot(whr_ref[i], h_shift, preferred_element_type=f32)
        z = jnp.maximum(z + b_ref[i], 0.0)            # F.relu(z_x + z_h), f32

        act = jnp.dot(wo_ref[i], z.astype(compute_dtype),
                      preferred_element_type=f32)
        act = jnp.maximum(act + bo_ref[i], 0.0)       # F.relu(output_conv)

        h_cur = h_shift                               # advance h alignment by s

    # output_layer(F.relu(output))  (relu kept for fidelity; idempotent here)
    out = jnp.dot(w_out_ref[...], jnp.maximum(act, 0.0).astype(compute_dtype),
                  preferred_element_type=f32)
    o_ref[...] = out + b_out_ref[...]                 # lane-dense (Co_pad, T)


# ------------------------------ weight packing ------------------------------- #

def pack_params(raw_layers, w_out, b_out, compute_dtype):
    """Stack per-layer Conv1d weights into a few trace-time arrays."""
    n = len(raw_layers)
    p0 = raw_layers[0][0]
    C = p0["wo"].shape[0]
    cd = compute_dtype

    # Layer 0 (in_channels == 1): x weights as a (C, 2) broadcast-scale table.
    wx0 = jnp.concatenate([p0["wxl"], p0["wxr"]], axis=1).astype(jnp.float32)

    # Layers 1..n-1 x weights, stacked (MXU operands -> compute dtype).
    if n > 1:
        wxl_all = jnp.stack([raw_layers[i][0]["wxl"] for i in range(1, n)]).astype(cd)
        wxr_all = jnp.stack([raw_layers[i][0]["wxr"] for i in range(1, n)]).astype(cd)
    else:  # unused dummy so the ref list is fixed
        wxl_all = jnp.zeros((1, C, C), cd)
        wxr_all = jnp.zeros((1, C, C), cd)

    whl_all = jnp.stack([p["whl"] for p, _ in raw_layers]).astype(cd)
    whr_all = jnp.stack([p["whr"] for p, _ in raw_layers]).astype(cd)
    wo_all = jnp.stack([p["wo"] for p, _ in raw_layers]).astype(cd)

    # Biases stay f32; the four input-conv biases fold into one per layer.
    b_all = jnp.stack([(p["bxl"] + p["bxr"] + p["bhl"] + p["bhr"])[:, None]
                       for p, _ in raw_layers]).astype(jnp.float32)
    bo_all = jnp.stack([p["bo"][:, None] for p, _ in raw_layers]).astype(jnp.float32)

    # Output conv: pad Co up to 8 sublanes (unmasked stores); crop in wrapper.
    Co = w_out.shape[0]
    Co_pad = ((Co + 7) // 8) * 8
    w_out_p = jnp.zeros((Co_pad, C), jnp.float32).at[:Co].set(w_out).astype(cd)
    b_out_p = jnp.zeros((Co_pad, 1), jnp.float32).at[:Co, 0].set(b_out)

    return (wx0, wxl_all, wxr_all, whl_all, whr_all, b_all, wo_all, bo_all,
            w_out_p, b_out_p)


# ------------------------------ wrapper / glue ------------------------------- #

def fftnet_forward(x, h, raw_layers, w_out, b_out, *,
                   compute_dtype=jnp.bfloat16):
    """x: (B, T, 1)   h: (B, Ch, T+1)   returns (B, out_channels, T - sum(shifts))."""
    B, T, _ = x.shape
    h = h[:, :, 1:]                                   # upsample_network=False path
    Ch = h.shape[1]
    C = raw_layers[0][0]["wo"].shape[0]
    Co = w_out.shape[0]
    shifts = tuple(s for _, s in raw_layers)
    L_final = T - sum(shifts)

    # Lane-dense time axis: pad T to a multiple of 128, crop after the call.
    T_pad = ((T + 127) // 128) * 128
    x_ct = jnp.transpose(x, (0, 2, 1))                # (B, 1, T) == x.transpose(1, 2)
    x_ct = jnp.pad(x_ct, ((0, 0), (0, 0), (0, T_pad - T)))
    h_p = jnp.pad(h, ((0, 0), (0, 0), (0, T_pad - T)))

    weights = pack_params(raw_layers, w_out, b_out, compute_dtype)
    Co_pad = weights[-2].shape[0]

    per_b = lambda b: (b, 0, 0)
    in_specs = [
        pl.BlockSpec((None, 1, T_pad), per_b),        # x row  (lane-dense)
        pl.BlockSpec((None, Ch, T_pad), per_b),       # local conditioning (NCL)
    ]
    for a in weights:                                 # constant across the grid
        in_specs.append(pl.BlockSpec(a.shape, lambda b, nd=a.ndim: (0,) * nd))

    # Advisory cost estimate so XLA schedules the fused call sensibly.
    per_col = 0
    for i, _ in enumerate(shifts):
        in_ch = 1 if i == 0 else C
        per_col += 2 * C * (2 * in_ch + 2 * Ch) + 2 * C * C
    per_col += 2 * Co_pad * C
    flops = int(B * T_pad * per_col)
    bytes_accessed = int(
        x_ct.size * 4 + h_p.size * 4 + B * Co_pad * T_pad * 4
        + sum(int(a.size) * a.dtype.itemsize for a in weights))

    kernel = functools.partial(fftnet_fused_kernel, shifts=shifts,
                               compute_dtype=compute_dtype)
    out = pl.pallas_call(
        kernel,
        out_shape=jax.ShapeDtypeStruct((B, Co_pad, T_pad), jnp.float32),
        grid=(B,),
        in_specs=in_specs,
        out_specs=pl.BlockSpec((None, Co_pad, T_pad), per_b),
        compiler_params=pltpu.CompilerParams(dimension_semantics=("parallel",)),
        cost_estimate=pl.CostEstimate(flops=flops, transcendentals=0,
                                      bytes_accessed=bytes_accessed),
    )(x_ct, h_p, *weights)

    # Crop padded output channels and the trailing (roll-garbage + pad) columns.
    return out[:, :Co, :L_final]


# ------------------------------ params / reference --------------------------- #

def init_fftnet_params(key, n_stacks, fft_channels, local_condition_channels,
                       out_channels, scale=0.1):
    """Raw (unpacked) Conv1d-style params: weights (out_ch, in_ch), biases (out_ch,)."""
    window_shifts = [2 ** i for i in range(n_stacks)]
    raw_layers = []
    keys = jax.random.split(key, n_stacks + 1)
    for i, shift in enumerate(reversed(window_shifts)):
        in_ch = 1 if shift == window_shifts[-1] else fft_channels
        k = jax.random.split(keys[i], 10)
        w = lambda kk, shp: jax.random.normal(kk, shp, jnp.float32) * scale
        p = {
            "wxl": w(k[0], (fft_channels, in_ch)), "bxl": w(k[1], (fft_channels,)),
            "wxr": w(k[2], (fft_channels, in_ch)), "bxr": w(k[3], (fft_channels,)),
            "whl": w(k[4], (fft_channels, local_condition_channels)),
            "bhl": w(k[5], (fft_channels,)),
            "whr": w(k[6], (fft_channels, local_condition_channels)),
            "bhr": w(k[7], (fft_channels,)),
            "wo": w(k[8], (fft_channels, fft_channels)), "bo": w(k[9], (fft_channels,)),
        }
        raw_layers.append((p, shift))
    ko = jax.random.split(keys[-1], 2)
    w_out = jax.random.normal(ko[0], (out_channels, fft_channels), jnp.float32) * scale
    b_out = jax.random.normal(ko[1], (out_channels,), jnp.float32) * scale
    return raw_layers, w_out, b_out


def fftnet_reference(x, h, raw_layers, w_out, b_out):
    """Pure-JAX mirror of the PyTorch forward (uses the RAW, unpacked params)."""
    h = h[:, :, 1:]
    out = jnp.transpose(x, (0, 2, 1))                 # (B, 1, T)
    for p, shift in raw_layers:
        Tc = out.shape[2]
        hh = h[:, :, -Tc:]
        L = Tc - shift
        xl = jnp.einsum("oi,bit->bot", p["wxl"], out[:, :, :L]) + p["bxl"][:, None]
        xr = jnp.einsum("oi,bit->bot", p["wxr"], out[:, :, shift:]) + p["bxr"][:, None]
        hl = jnp.einsum("oi,bit->bot", p["whl"], hh[:, :, :L]) + p["bhl"][:, None]
        hr = jnp.einsum("oi,bit->bot", p["whr"], hh[:, :, shift:]) + p["bhr"][:, None]
        z = jax.nn.relu(xl + xr + hl + hr)
        out = jax.nn.relu(jnp.einsum("oi,bit->bot", p["wo"], z) + p["bo"][:, None])
    out = jnp.einsum("oi,bit->bot", w_out, jax.nn.relu(out)) + b_out[:, None]
    return out                                        # (B, out_channels, L_final)


if __name__ == "__main__":
    # Small config consistent with FFTNet(n_stacks, fft_channels, ...,
    # local_condition_channels != None, out_type='Gaussian').
    n_stacks = 3                  # window_shifts = [1, 2, 4]
    fft_channels = 32
    local_condition_channels = 8
    out_channels = 2
    B, T = 2, 16                  # x: (B, T, 1);  h: (B, Ch, T + 1)

    key = jax.random.PRNGKey(0)
    kp, kx, kh = jax.random.split(key, 3)
    raw_layers, w_out, b_out = init_fftnet_params(
        kp, n_stacks, fft_channels, local_condition_channels, out_channels)

    x = jax.random.normal(kx, (B, T, 1), jnp.float32)
    h = jax.random.normal(kh, (B, local_condition_channels, T + 1), jnp.float32)

    ref = jax.block_until_ready(fftnet_reference(x, h, raw_layers, w_out, b_out))
    L_final = T - sum(2 ** i for i in range(n_stacks))

    # f32 path: tight structural check of the roll/alignment logic.
    out_f32 = jax.block_until_ready(
        fftnet_forward(x, h, raw_layers, w_out, b_out, compute_dtype=jnp.float32))
    assert out_f32.shape == (B, out_channels, L_final)
    assert jnp.allclose(out_f32, ref, atol=1e-3, rtol=1e-3), "f32 kernel mismatch"

    # bf16-MXU path (production): looser tolerance is expected bf16 precision
    # loss vs the f32 reference, not a bug.
    out_bf16 = jax.block_until_ready(
        fftnet_forward(x, h, raw_layers, w_out, b_out, compute_dtype=jnp.bfloat16))
    assert out_bf16.shape == (B, out_channels, L_final)
    assert jnp.allclose(out_bf16, ref, atol=5e-2, rtol=5e-2), "bf16 kernel mismatch"

    print("KERNEL_OK")
</pallas_src>

<mosaic_0001>
module attributes {stable_mosaic.version = 11 : i64} {
  func.func @fftnet_fused_kernel(%arg0: i32, %arg1: memref<1x1x128xf32, #tpu.memory_space<vmem>>, %arg2: memref<1x8x128xf32, #tpu.memory_space<vmem>>, %arg3: memref<32x2xf32, #tpu.memory_space<vmem>>, %arg4: memref<2x32x32xf32, #tpu.memory_space<vmem>>, %arg5: memref<2x32x32xf32, #tpu.memory_space<vmem>>, %arg6: memref<3x32x8xf32, #tpu.memory_space<vmem>>, %arg7: memref<3x32x8xf32, #tpu.memory_space<vmem>>, %arg8: memref<3x32x1xf32, #tpu.memory_space<vmem>>, %arg9: memref<3x32x32xf32, #tpu.memory_space<vmem>>, %arg10: memref<3x32x1xf32, #tpu.memory_space<vmem>>, %arg11: memref<8x32xf32, #tpu.memory_space<vmem>>, %arg12: memref<8x1xf32, #tpu.memory_space<vmem>>, %arg13: memref<1x8x128xf32, #tpu.memory_space<vmem>>) attributes {dimension_semantics = [#tpu.dimension_semantics<parallel>], iteration_bounds = array<i64: 2>, scalar_prefetch = 0 : i64, scratch_operands = 0 : i64, tpu.core_type = #tpu.core_type<tc>, window_params = [{transform_indices = @transform_0, window_bounds = array<i64: 1, 1, 128>}, {transform_indices = @transform_1, window_bounds = array<i64: 1, 8, 128>}, {pipeline_mode = #tpu.pipeline_mode<synchronous>, transform_indices = @transform_2, window_bounds = array<i64: 32, 2>}, {pipeline_mode = #tpu.pipeline_mode<synchronous>, transform_indices = @transform_3, window_bounds = array<i64: 2, 32, 32>}, {pipeline_mode = #tpu.pipeline_mode<synchronous>, transform_indices = @transform_4, window_bounds = array<i64: 2, 32, 32>}, {pipeline_mode = #tpu.pipeline_mode<synchronous>, transform_indices = @transform_5, window_bounds = array<i64: 3, 32, 8>}, {pipeline_mode = #tpu.pipeline_mode<synchronous>, transform_indices = @transform_6, window_bounds = array<i64: 3, 32, 8>}, {pipeline_mode = #tpu.pipeline_mode<synchronous>, transform_indices = @transform_7, window_bounds = array<i64: 3, 32, 1>}, {pipeline_mode = #tpu.pipeline_mode<synchronous>, transform_indices = @transform_8, window_bounds = array<i64: 3, 32, 32>}, {pipeline_mode = #tpu.pipeline_mode<synchronous>, transform_indices = @transform_9, window_bounds = array<i64: 3, 32, 1>}, {pipeline_mode = #tpu.pipeline_mode<synchronous>, transform_indices = @transform_10, window_bounds = array<i64: 8, 32>}, {pipeline_mode = #tpu.pipeline_mode<synchronous>, transform_indices = @transform_11, window_bounds = array<i64: 8, 1>}, {transform_indices = @transform_12, window_bounds = array<i64: 1, 8, 128>}]} {
    %c0 = arith.constant 0 : index
    %c0_0 = arith.constant 0 : index
    %c0_1 = arith.constant 0 : index
    %0 = vector.load %arg1[%c0, %c0_0, %c0_1] : memref<1x1x128xf32, #tpu.memory_space<vmem>>, vector<1x1x128xf32>
    %1 = vector.shape_cast %0 : vector<1x1x128xf32> to vector<1x128xf32>
    %c0_2 = arith.constant 0 : index
    %c0_3 = arith.constant 0 : index
    %c0_4 = arith.constant 0 : index
    %2 = vector.load %arg2[%c0_2, %c0_3, %c0_4] : memref<1x8x128xf32, #tpu.memory_space<vmem>>, vector<1x8x128xf32>
    %3 = vector.shape_cast %2 : vector<1x8x128xf32> to vector<8x128xf32>
    %c124_i32 = arith.constant 124 : i32
    %4 = tpu.dynamic_rotate %3 by %c124_i32 dim 1 : vector<8x128xf32>, i32 -> vector<8x128xf32>
    %c0_5 = arith.constant 0 : index
    %c0_6 = arith.constant 0 : index
    %5 = vector.load %arg3[%c0_5, %c0_6] : memref<32x2xf32, #tpu.memory_space<vmem>>, vector<32x2xf32>
    %c124_i32_7 = arith.constant 124 : i32
    %6 = tpu.dynamic_rotate %1 by %c124_i32_7 dim 1 : vector<1x128xf32>, i32 -> vector<1x128xf32>
    %7 = vector.extract_strided_slice %5 {offsets = [0, 0], sizes = [32, 1], strides = [1, 1]} : vector<32x2xf32> to vector<32x1xf32>
    %8 = vector.broadcast %7 : vector<32x1xf32> to vector<32x128xf32>
    %9 = vector.broadcast %1 : vector<1x128xf32> to vector<32x128xf32>
    %10 = arith.mulf %8, %9 : vector<32x128xf32>
    %11 = vector.extract_strided_slice %5 {offsets = [0, 1], sizes = [32, 1], strides = [1, 1]} : vector<32x2xf32> to vector<32x1xf32>
    %12 = vector.broadcast %11 : vector<32x1xf32> to vector<32x128xf32>
    %13 = vector.broadcast %6 : vector<1x128xf32> to vector<32x128xf32>
    %14 = arith.mulf %12, %13 : vector<32x128xf32>
    %15 = arith.addf %10, %14 : vector<32x128xf32>
    %c0_8 = arith.constant 0 : index
    %c0_9 = arith.constant 0 : index
    %c0_10 = arith.constant 0 : index
    %16 = vector.load %arg6[%c0_8, %c0_9, %c0_10] : memref<3x32x8xf32, #tpu.memory_space<vmem>>, vector<1x32x8xf32>
    %17 = vector.shape_cast %16 : vector<1x32x8xf32> to vector<32x8xf32>
    %cst = arith.constant dense<0.000000e+00> : vector<32x128xf32>
    %18 = tpu.matmul %17, %3, %cst {dimension_numbers = #tpu.dot_dimension_numbers<[1], [0], [0], [1], [0, 0, 1, 1], [], []>} : vector<32x8xf32>, vector<8x128xf32>, vector<32x128xf32> -> vector<32x128xf32>
    %19 = arith.addf %15, %18 : vector<32x128xf32>
    %c0_11 = arith.constant 0 : index
    %c0_12 = arith.constant 0 : index
    %c0_13 = arith.constant 0 : index
    %20 = vector.load %arg7[%c0_11, %c0_12, %c0_13] : memref<3x32x8xf32, #tpu.memory_space<vmem>>, vector<1x32x8xf32>
    %21 = vector.shape_cast %20 : vector<1x32x8xf32> to vector<32x8xf32>
    %cst_14 = arith.constant dense<0.000000e+00> : vector<32x128xf32>
    %22 = tpu.matmul %21, %4, %cst_14 {dimension_numbers = #tpu.dot_dimension_numbers<[1], [0], [0], [1], [0, 0, 1, 1], [], []>} : vector<32x8xf32>, vector<8x128xf32>, vector<32x128xf32> -> vector<32x128xf32>
    %23 = arith.addf %19, %22 : vector<32x128xf32>
    %c0_15 = arith.constant 0 : index
    %c0_16 = arith.constant 0 : index
    %c0_17 = arith.constant 0 : index
    %24 = vector.load %arg8[%c0_15, %c0_16, %c0_17] : memref<3x32x1xf32, #tpu.memory_space<vmem>>, vector<1x32x1xf32>
    %25 = vector.shape_cast %24 : vector<1x32x1xf32> to vector<32x1xf32>
    %26 = vector.broadcast %25 : vector<32x1xf32> to vector<32x128xf32>
    %27 = arith.addf %23, %26 : vector<32x128xf32>
    %cst_18 = arith.constant 0.000000e+00 : f32
    %28 = vector.broadcast %cst_18 : f32 to vector<32x128xf32>
    %29 = arith.maximumf %27, %28 : vector<32x128xf32>
    %c0_19 = arith.constant 0 : index
    %c0_20 = arith.constant 0 : index
    %c0_21 = arith.constant 0 : index
    %30 = vector.load %arg9[%c0_19, %c0_20, %c0_21] : memref<3x32x32xf32, #tpu.memory_space<vmem>>, vector<1x32x32xf32>
    %31 = vector.shape_cast %30 : vector<1x32x32xf32> to vector<32x32xf32>
    %cst_22 = arith.constant dense<0.000000e+00> : vector<32x128xf32>
    %32 = tpu.matmul %31, %29, %cst_22 {dimension_numbers = #tpu.dot_dimension_numbers<[1], [0], [0], [1], [0, 0, 1, 1], [], []>} : vector<32x32xf32>, vector<32x128xf32>, vector<32x128xf32> -> vector<32x128xf32>
    %c0_23 = arith.constant 0 : index
    %c0_24 = arith.constant 0 : index
    %c0_25 = arith.constant 0 : index
    %33 = vector.load %arg10[%c0_23, %c0_24, %c0_25] : memref<3x32x1xf32, #tpu.memory_space<vmem>>, vector<1x32x1xf32>
    %34 = vector.shape_cast %33 : vector<1x32x1xf32> to vector<32x1xf32>
    %35 = vector.broadcast %34 : vector<32x1xf32> to vector<32x128xf32>
    %36 = arith.addf %32, %35 : vector<32x128xf32>
    %cst_26 = arith.constant 0.000000e+00 : f32
    %37 = vector.broadcast %cst_26 : f32 to vector<32x128xf32>
    %38 = arith.maximumf %36, %37 : vector<32x128xf32>
    %c126_i32 = arith.constant 126 : i32
    %39 = tpu.dynamic_rotate %4 by %c126_i32 dim 1 : vector<8x128xf32>, i32 -> vector<8x128xf32>
    %c126_i32_27 = arith.constant 126 : i32
    %40 = tpu.dynamic_rotate %38 by %c126_i32_27 dim 1 : vector<32x128xf32>, i32 -> vector<32x128xf32>
    %c0_28 = arith.constant 0 : index
    %c0_29 = arith.constant 0 : index
    %c0_30 = arith.constant 0 : index
    %41 = vector.load %arg4[%c0_28, %c0_29, %c0_30] : memref<2x32x32xf32, #tpu.memory_space<vmem>>, vector<1x32x32xf32>
    %42 = vector.shape_cast %41 : vector<1x32x32xf32> to vector<32x32xf32>
    %cst_31 = arith.constant dense<0.000000e+00> : vector<32x128xf32>
    %43 = tpu.matmul %42, %38, %cst_31 {dimension_numbers = #tpu.dot_dimension_numbers<[1], [0], [0], [1], [0, 0, 1, 1], [], []>} : vector<32x32xf32>, vector<32x128xf32>, vector<32x128xf32> -> vector<32x128xf32>
    %c0_32 = arith.constant 0 : index
    %c0_33 = arith.constant 0 : index
    %c0_34 = arith.constant 0 : index
    %44 = vector.load %arg5[%c0_32, %c0_33, %c0_34] : memref<2x32x32xf32, #tpu.memory_space<vmem>>, vector<1x32x32xf32>
    %45 = vector.shape_cast %44 : vector<1x32x32xf32> to vector<32x32xf32>
    %cst_35 = arith.constant dense<0.000000e+00> : vector<32x128xf32>
    %46 = tpu.matmul %45, %40, %cst_35 {dimension_numbers = #tpu.dot_dimension_numbers<[1], [0], [0], [1], [0, 0, 1, 1], [], []>} : vector<32x32xf32>, vector<32x128xf32>, vector<32x128xf32> -> vector<32x128xf32>
    %47 = arith.addf %43, %46 : vector<32x128xf32>
    %c1 = arith.constant 1 : index
    %c0_36 = arith.constant 0 : index
    %c0_37 = arith.constant 0 : index
    %48 = vector.load %arg6[%c1, %c0_36, %c0_37] : memref<3x32x8xf32, #tpu.memory_space<vmem>>, vector<1x32x8xf32>
    %49 = vector.shape_cast %48 : vector<1x32x8xf32> to vector<32x8xf32>
    %cst_38 = arith.constant dense<0.000000e+00> : vector<32x128xf32>
    %50 = tpu.matmul %49, %4, %cst_38 {dimension_numbers = #tpu.dot_dimension_numbers<[1], [0], [0], [1], [0, 0, 1, 1], [], []>} : vector<32x8xf32>, vector<8x128xf32>, vector<32x128xf32> -> vector<32x128xf32>
    %51 = arith.addf %47, %50 : vector<32x128xf32>
    %c1_39 = arith.constant 1 : index
    %c0_40 = arith.constant 0 : index
    %c0_41 = arith.constant 0 : index
    %52 = vector.load %arg7[%c1_39, %c0_40, %c0_41] : memref<3x32x8xf32, #tpu.memory_space<vmem>>, vector<1x32x8xf32>
    %53 = vector.shape_cast %52 : vector<1x32x8xf32> to vector<32x8xf32>
    %cst_42 = arith.constant dense<0.000000e+00> : vector<32x128xf32>
    %54 = tpu.matmul %53, %39, %cst_42 {dimension_numbers = #tpu.dot_dimension_numbers<[1], [0], [0], [1], [0, 0, 1, 1], [], []>} : vector<32x8xf32>, vector<8x128xf32>, vector<32x128xf32> -> vector<32x128xf32>
    %55 = arith.addf %51, %54 : vector<32x128xf32>
    %c1_43 = arith.constant 1 : index
    %c0_44 = arith.constant 0 : index
    %c0_45 = arith.constant 0 : index
    %56 = vector.load %arg8[%c1_43, %c0_44, %c0_45] : memref<3x32x1xf32, #tpu.memory_space<vmem>>, vector<1x32x1xf32>
    %57 = vector.shape_cast %56 : vector<1x32x1xf32> to vector<32x1xf32>
    %58 = vector.broadcast %57 : vector<32x1xf32> to vector<32x128xf32>
    %59 = arith.addf %55, %58 : vector<32x128xf32>
    %cst_46 = arith.constant 0.000000e+00 : f32
    %60 = vector.broadcast %cst_46 : f32 to vector<32x128xf32>
    %61 = arith.maximumf %59, %60 : vector<32x128xf32>
    %c1_47 = arith.constant 1 : index
    %c0_48 = arith.constant 0 : index
    %c0_49 = arith.constant 0 : index
    %62 = vector.load %arg9[%c1_47, %c0_48, %c0_49] : memref<3x32x32xf32, #tpu.memory_space<vmem>>, vector<1x32x32xf32>
    %63 = vector.shape_cast %62 : vector<1x32x32xf32> to vector<32x32xf32>
    %cst_50 = arith.constant dense<0.000000e+00> : vector<32x128xf32>
    %64 = tpu.matmul %63, %61, %cst_50 {dimension_numbers = #tpu.dot_dimension_numbers<[1], [0], [0], [1], [0, 0, 1, 1], [], []>} : vector<32x32xf32>, vector<32x128xf32>, vector<32x128xf32> -> vector<32x128xf32>
    %c1_51 = arith.constant 1 : index
    %c0_52 = arith.constant 0 : index
    %c0_53 = arith.constant 0 : index
    %65 = vector.load %arg10[%c1_51, %c0_52, %c0_53] : memref<3x32x1xf32, #tpu.memory_space<vmem>>, vector<1x32x1xf32>
    %66 = vector.shape_cast %65 : vector<1x32x1xf32> to vector<32x1xf32>
    %67 = vector.broadcast %66 : vector<32x1xf32> to vector<32x128xf32>
    %68 = arith.addf %64, %67 : vector<32x128xf32>
    %cst_54 = arith.constant 0.000000e+00 : f32
    %69 = vector.broadcast %cst_54 : f32 to vector<32x128xf32>
    %70 = arith.maximumf %68, %69 : vector<32x128xf32>
    %c127_i32 = arith.constant 127 : i32
    %71 = tpu.dynamic_rotate %39 by %c127_i32 dim 1 : vector<8x128xf32>, i32 -> vector<8x128xf32>
    %c127_i32_55 = arith.constant 127 : i32
    %72 = tpu.dynamic_rotate %70 by %c127_i32_55 dim 1 : vector<32x128xf32>, i32 -> vector<32x128xf32>
    %c1_56 = arith.constant 1 : index
    %c0_57 = arith.constant 0 : index
    %c0_58 = arith.constant 0 : index
    %73 = vector.load %arg4[%c1_56, %c0_57, %c0_58] : memref<2x32x32xf32, #tpu.memory_space<vmem>>, vector<1x32x32xf32>
    %74 = vector.shape_cast %73 : vector<1x32x32xf32> to vector<32x32xf32>
    %cst_59 = arith.constant dense<0.000000e+00> : vector<32x128xf32>
    %75 = tpu.matmul %74, %70, %cst_59 {dimension_numbers = #tpu.dot_dimension_numbers<[1], [0], [0], [1], [0, 0, 1, 1], [], []>} : vector<32x32xf32>, vector<32x128xf32>, vector<32x128xf32> -> vector<32x128xf32>
    %c1_60 = arith.constant 1 : index
    %c0_61 = arith.constant 0 : index
    %c0_62 = arith.constant 0 : index
    %76 = vector.load %arg5[%c1_60, %c0_61, %c0_62] : memref<2x32x32xf32, #tpu.memory_space<vmem>>, vector<1x32x32xf32>
    %77 = vector.shape_cast %76 : vector<1x32x32xf32> to vector<32x32xf32>
    %cst_63 = arith.constant dense<0.000000e+00> : vector<32x128xf32>
    %78 = tpu.matmul %77, %72, %cst_63 {dimension_numbers = #tpu.dot_dimension_numbers<[1], [0], [0], [1], [0, 0, 1, 1], [], []>} : vector<32x32xf32>, vector<32x128xf32>, vector<32x128xf32> -> vector<32x128xf32>
    %79 = arith.addf %75, %78 : vector<32x128xf32>
    %c2 = arith.constant 2 : index
    %c0_64 = arith.constant 0 : index
    %c0_65 = arith.constant 0 : index
    %80 = vector.load %arg6[%c2, %c0_64, %c0_65] : memref<3x32x8xf32, #tpu.memory_space<vmem>>, vector<1x32x8xf32>
    %81 = vector.shape_cast %80 : vector<1x32x8xf32> to vector<32x8xf32>
    %cst_66 = arith.constant dense<0.000000e+00> : vector<32x128xf32>
    %82 = tpu.matmul %81, %39, %cst_66 {dimension_numbers = #tpu.dot_dimension_numbers<[1], [0], [0], [1], [0, 0, 1, 1], [], []>} : vector<32x8xf32>, vector<8x128xf32>, vector<32x128xf32> -> vector<32x128xf32>
    %83 = arith.addf %79, %82 : vector<32x128xf32>
    %c2_67 = arith.constant 2 : index
    %c0_68 = arith.constant 0 : index
    %c0_69 = arith.constant 0 : index
    %84 = vector.load %arg7[%c2_67, %c0_68, %c0_69] : memref<3x32x8xf32, #tpu.memory_space<vmem>>, vector<1x32x8xf32>
    %85 = vector.shape_cast %84 : vector<1x32x8xf32> to vector<32x8xf32>
    %cst_70 = arith.constant dense<0.000000e+00> : vector<32x128xf32>
    %86 = tpu.matmul %85, %71, %cst_70 {dimension_numbers = #tpu.dot_dimension_numbers<[1], [0], [0], [1], [0, 0, 1, 1], [], []>} : vector<32x8xf32>, vector<8x128xf32>, vector<32x128xf32> -> vector<32x128xf32>
    %87 = arith.addf %83, %86 : vector<32x128xf32>
    %c2_71 = arith.constant 2 : index
    %c0_72 = arith.constant 0 : index
    %c0_73 = arith.constant 0 : index
    %88 = vector.load %arg8[%c2_71, %c0_72, %c0_73] : memref<3x32x1xf32, #tpu.memory_space<vmem>>, vector<1x32x1xf32>
    %89 = vector.shape_cast %88 : vector<1x32x1xf32> to vector<32x1xf32>
    %90 = vector.broadcast %89 : vector<32x1xf32> to vector<32x128xf32>
    %91 = arith.addf %87, %90 : vector<32x128xf32>
    %cst_74 = arith.constant 0.000000e+00 : f32
    %92 = vector.broadcast %cst_74 : f32 to vector<32x128xf32>
    %93 = arith.maximumf %91, %92 : vector<32x128xf32>
    %c2_75 = arith.constant 2 : index
    %c0_76 = arith.constant 0 : index
    %c0_77 = arith.constant 0 : index
    %94 = vector.load %arg9[%c2_75, %c0_76, %c0_77] : memref<3x32x32xf32, #tpu.memory_space<vmem>>, vector<1x32x32xf32>
    %95 = vector.shape_cast %94 : vector<1x32x32xf32> to vector<32x32xf32>
    %cst_78 = arith.constant dense<0.000000e+00> : vector<32x128xf32>
    %96 = tpu.matmul %95, %93, %cst_78 {dimension_numbers = #tpu.dot_dimension_numbers<[1], [0], [0], [1], [0, 0, 1, 1], [], []>} : vector<32x32xf32>, vector<32x128xf32>, vector<32x128xf32> -> vector<32x128xf32>
    %c2_79 = arith.constant 2 : index
    %c0_80 = arith.constant 0 : index
    %c0_81 = arith.constant 0 : index
    %97 = vector.load %arg10[%c2_79, %c0_80, %c0_81] : memref<3x32x1xf32, #tpu.memory_space<vmem>>, vector<1x32x1xf32>
    %98 = vector.shape_cast %97 : vector<1x32x1xf32> to vector<32x1xf32>
    %99 = vector.broadcast %98 : vector<32x1xf32> to vector<32x128xf32>
    %100 = arith.addf %96, %99 : vector<32x128xf32>
    %cst_82 = arith.constant 0.000000e+00 : f32
    %101 = vector.broadcast %cst_82 : f32 to vector<32x128xf32>
    %102 = arith.maximumf %100, %101 : vector<32x128xf32>
    %c0_83 = arith.constant 0 : index
    %c0_84 = arith.constant 0 : index
    %103 = vector.load %arg11[%c0_83, %c0_84] : memref<8x32xf32, #tpu.memory_space<vmem>>, vector<8x32xf32>
    %cst_85 = arith.constant 0.000000e+00 : f32
    %104 = vector.broadcast %cst_85 : f32 to vector<32x128xf32>
    %105 = arith.maximumf %102, %104 : vector<32x128xf32>
    %cst_86 = arith.constant dense<0.000000e+00> : vector<8x128xf32>
    %106 = tpu.matmul %103, %105, %cst_86 {dimension_numbers = #tpu.dot_dimension_numbers<[1], [0], [0], [1], [0, 0, 1, 1], [], []>} : vector<8x32xf32>, vector<32x128xf32>, vector<8x128xf32> -> vector<8x128xf32>
    %c0_87 = arith.constant 0 : index
    %c0_88 = arith.constant 0 : index
    %107 = vector.load %arg12[%c0_87, %c0_88] : memref<8x1xf32, #tpu.memory_space<vmem>>, vector<8x1xf32>
    %108 = vector.broadcast %107 : vector<8x1xf32> to vector<8x128xf32>
    %109 = arith.addf %106, %108 : vector<8x128xf32>
    %c0_89 = arith.constant 0 : index
    %c0_90 = arith.constant 0 : index
    %c0_91 = arith.constant 0 : index
    %110 = vector.load %arg13[%c0_89, %c0_90, %c0_91] : memref<1x8x128xf32, #tpu.memory_space<vmem>>, vector<1x8x128xf32>
    %111 = vector.shape_cast %110 : vector<1x8x128xf32> to vector<8x128xf32>
    %112 = vector.shape_cast %109 : vector<8x128xf32> to vector<1x8x128xf32>
    tpu.vector_store %arg13[%c0_89, %c0_90, %c0_91], %112 {strides = array<i32>} : memref<1x8x128xf32, #tpu.memory_space<vmem>>, vector<1x8x128xf32>,
    return
  }
  func.func @transform_0(%arg0: i32) -> (i32, i32, i32) {
    %c0_i32 = arith.constant 0 : i32
    %c0_i32_0 = arith.constant 0 : i32
    %c0_i32_1 = arith.constant 0 : i32
    return %arg0, %c0_i32, %c0_i32_0 : i32, i32, i32
  }
  func.func @transform_1(%arg0: i32) -> (i32, i32, i32) {
    %c0_i32 = arith.constant 0 : i32
    %c0_i32_0 = arith.constant 0 : i32
    %c0_i32_1 = arith.constant 0 : i32
    return %arg0, %c0_i32, %c0_i32_0 : i32, i32, i32
  }
  func.func @transform_2(%arg0: i32) -> (i32, i32) {
    %c0_i32 = arith.constant 0 : i32
    %c0_i32_0 = arith.constant 0 : i32
    %c0_i32_1 = arith.constant 0 : i32
    return %c0_i32, %c0_i32_0 : i32, i32
  }
  func.func @transform_3(%arg0: i32) -> (i32, i32, i32) {
    %c0_i32 = arith.constant 0 : i32
    %c0_i32_0 = arith.constant 0 : i32
    %c0_i32_1 = arith.constant 0 : i32
    %c0_i32_2 = arith.constant 0 : i32
    return %c0_i32, %c0_i32_0, %c0_i32_1 : i32, i32, i32
  }
  func.func @transform_4(%arg0: i32) -> (i32, i32, i32) {
    %c0_i32 = arith.constant 0 : i32
    %c0_i32_0 = arith.constant 0 : i32
    %c0_i32_1 = arith.constant 0 : i32
    %c0_i32_2 = arith.constant 0 : i32
    return %c0_i32, %c0_i32_0, %c0_i32_1 : i32, i32, i32
  }
  func.func @transform_5(%arg0: i32) -> (i32, i32, i32) {
    %c0_i32 = arith.constant 0 : i32
    %c0_i32_0 = arith.constant 0 : i32
    %c0_i32_1 = arith.constant 0 : i32
    %c0_i32_2 = arith.constant 0 : i32
    return %c0_i32, %c0_i32_0, %c0_i32_1 : i32, i32, i32
  }
  func.func @transform_6(%arg0: i32) -> (i32, i32, i32) {
    %c0_i32 = arith.constant 0 : i32
    %c0_i32_0 = arith.constant 0 : i32
    %c0_i32_1 = arith.constant 0 : i32
    %c0_i32_2 = arith.constant 0 : i32
    return %c0_i32, %c0_i32_0, %c0_i32_1 : i32, i32, i32
  }
  func.func @transform_7(%arg0: i32) -> (i32, i32, i32) {
    %c0_i32 = arith.constant 0 : i32
    %c0_i32_0 = arith.constant 0 : i32
    %c0_i32_1 = arith.constant 0 : i32
    %c0_i32_2 = arith.constant 0 : i32
    return %c0_i32, %c0_i32_0, %c0_i32_1 : i32, i32, i32
  }
  func.func @transform_8(%arg0: i32) -> (i32, i32, i32) {
    %c0_i32 = arith.constant 0 : i32
    %c0_i32_0 = arith.constant 0 : i32
    %c0_i32_1 = arith.constant 0 : i32
    %c0_i32_2 = arith.constant 0 : i32
    return %c0_i32, %c0_i32_0, %c0_i32_1 : i32, i32, i32
  }
  func.func @transform_9(%arg0: i32) -> (i32, i32, i32) {
    %c0_i32 = arith.constant 0 : i32
    %c0_i32_0 = arith.constant 0 : i32
    %c0_i32_1 = arith.constant 0 : i32
    %c0_i32_2 = arith.constant 0 : i32
    return %c0_i32, %c0_i32_0, %c0_i32_1 : i32, i32, i32
  }
  func.func @transform_10(%arg0: i32) -> (i32, i32) {
    %c0_i32 = arith.constant 0 : i32
    %c0_i32_0 = arith.constant 0 : i32
    %c0_i32_1 = arith.constant 0 : i32
    return %c0_i32, %c0_i32_0 : i32, i32
  }
  func.func @transform_11(%arg0: i32) -> (i32, i32) {
    %c0_i32 = arith.constant 0 : i32
    %c0_i32_0 = arith.constant 0 : i32
    %c0_i32_1 = arith.constant 0 : i32
    return %c0_i32, %c0_i32_0 : i32, i32
  }
  func.func @transform_12(%arg0: i32) -> (i32, i32, i32) {
    %c0_i32 = arith.constant 0 : i32
    %c0_i32_0 = arith.constant 0 : i32
    %c0_i32_1 = arith.constant 0 : i32
    return %arg0, %c0_i32, %c0_i32_0 : i32, i32, i32
  }
}

</mosaic_0001>

<llo_original>
// kernel: tpu_custom_call.1
$region0: #{tpu_custom_call.1}
  #allocation0 [shape = 'u32[]', space=smem, size = 0x4, offset = 0x4, fixed_abs, tag = 'smem constant byte address 0x4 - core index']
  #allocation1 [shape = 'u32[72,128]{1,0:T(1,128)}', space=vmem, size = 0x9000, scoped, tag = 'internal scratch']
  %s0 = inlined_call_operand.vmem [shape: f32[2,1,128], index: 0, kind: input, shape index: {}]
  %s1 = inlined_call_operand.vmem [shape: f32[2,8,128], index: 1, kind: input, shape index: {}]
  %s2 = inlined_call_operand.vmem [shape: f32[32,2], index: 2, kind: input, shape index: {}]
  %s3 = inlined_call_operand.vmem [shape: f32[2,32,32], index: 3, kind: input, shape index: {}]
  %s4 = inlined_call_operand.vmem [shape: f32[2,32,32], index: 4, kind: input, shape index: {}]
  %s5 = inlined_call_operand.vmem [shape: f32[3,32,8], index: 5, kind: input, shape index: {}]
  %s6 = inlined_call_operand.vmem [shape: f32[3,32,8], index: 6, kind: input, shape index: {}]
  %s7 = inlined_call_operand.vmem [shape: f32[3,32,1], index: 7, kind: input, shape index: {}]
  %s8 = inlined_call_operand.vmem [shape: f32[3,32,32], index: 8, kind: input, shape index: {}]
  %s9 = inlined_call_operand.vmem [shape: f32[3,32,1], index: 9, kind: input, shape index: {}]
  %s10 = inlined_call_operand.vmem [shape: f32[8,32], index: 10, kind: input, shape index: {}]
  %s11 = inlined_call_operand.vmem [shape: f32[8,1], index: 11, kind: input, shape index: {}]
  %s12 = inlined_call_operand.hbm [shape: f32[2,8,128], index: 12, kind: output, shape index: {}]
  %s13 = sld [smem:[#allocation0]]
  $region81: #{tpu_custom_call.1} parent=0
    _
  %s15 = ssub.s32 1, %s13
  %s16 = scalar_select 0, %s15, %s13
  $region1: #{tpu_custom_call.1} parent=0
    #allocation2 [shape = 'u8[8192]{0}', space=vmem, size = 0x2000, scoped, tag = 'output window, operand 0']
    #allocation3 [shape = 's32[2]{0}', space=sflag, size = 0x8, scoped, tag = 'scoped memory for tpu_custom_call.1']
    %17 = vsyncpa [#allocation3], 0
    %s18 = scalar_lea.sflag [#allocation3], 1
    %19 = vsyncpa %s18, 0
    loop: start=0, step=1, limit=4
    $region2: #{tpu_custom_call.1} parent=1 // loop_pre_header
      _
    $region3: #{tpu_custom_call.1} parent=1 // loop_header
      %s21 = sphi 0, %s25
      %p22 = scmp.ge.s32.totalorder %s21, 4
      %s31 = sphi 0, %s33
      %s34 = sphi 0, %s31
      %s35 = sphi 0, %s34
      %s51 = sphi 0, %s35
      %s57 = sphi 0, %s59
      %s60 = sphi 0, %s57
      %s61 = sphi 0, %s60
      %s77 = sphi 0, %s61
      %s81 = sphi 0, %s81
      %s83 = sphi 0, %s81
      %s84 = sphi 0, %s83
      %s98 = sphi 0, %s84
      %s102 = sphi 0, %s102
      %s104 = sphi 0, %s102
      %s105 = sphi 0, %s104
      %s119 = sphi 0, %s105
      %s123 = sphi 0, %s123
      %s125 = sphi 0, %s123
      %s126 = sphi 0, %s125
      %s140 = sphi 0, %s126
      %s144 = sphi 0, %s144
      %s146 = sphi 0, %s144
      %s147 = sphi 0, %s146
      %s161 = sphi 0, %s147
      %s165 = sphi 0, %s165
      %s167 = sphi 0, %s165
      %s168 = sphi 0, %s167
      %s182 = sphi 0, %s168
      %s186 = sphi 0, %s186
      %s188 = sphi 0, %s186
      %s189 = sphi 0, %s188
      %s203 = sphi 0, %s189
      %s207 = sphi 0, %s207
      %s209 = sphi 0, %s207
      %s210 = sphi 0, %s209
      %s224 = sphi 0, %s210
      %s228 = sphi 0, %s228
      %s230 = sphi 0, %s228
      %s231 = sphi 0, %s230
      %s245 = sphi 0, %s231
      %s249 = sphi 0, %s249
      %s251 = sphi 0, %s249
      %s252 = sphi 0, %s251
      %s266 = sphi 0, %s252
      %s270 = sphi 0, %s270
      %s272 = sphi 0, %s270
      %s273 = sphi 0, %s272
      %s287 = sphi 0, %s273
      %s293 = sphi 0, %s295
      %s296 = sphi 0, %s293
      %s297 = sphi 0, %s296
      %s313 = sphi 0, %s297
    $region4: #{tpu_custom_call.1} parent=1 // loop_header_branch
      %24 = sbr.rel (%p22) target = $region8
    $region5: #{tpu_custom_call.1} parent=1 // loop_body
      %s26 = ssub.s32 %s21, 1
      %s27 = ssub.s32 %s21, 2
      %s28 = sadd.s32 %s21, 1
      %s29 = ssub.s32 %s21, %s28
      %p30 = scmp.eq.s32.totalorder %s29, 0
      %s32 = sadd.s32 %s31, 1
      %s33 = scalar_select %p30, %s31, %s32
      %p36 = pneg %p30
      %p37 = scmp.eq.s32.totalorder %s21, 1
      %p38 = por %p36, %p37
      %p39 = scmp.ne.s32.totalorder %s31, %s34
      %p40 = scmp.eq.s32.totalorder %s21, 0
      %p41 = por %p39, %p40
      %p42 = scmp.ne.s32.totalorder %s31, %s34
      %p43 = scmp.eq.s32.totalorder %s26, 1
      %p44 = por %p42, %p43
      %p45 = scmp.ne.s32.totalorder %s34, %s35
      %p46 = scmp.eq.s32.totalorder %s26, 0
      %p47 = por %p45, %p46
      %p48 = scmp.ne.s32.totalorder %s34, %s35
      %p49 = scmp.eq.s32.totalorder %s27, 1
      %p50 = por %p48, %p49
      %p52 = scmp.ne.s32.totalorder %s35, %s51
      %p53 = scmp.eq.s32.totalorder %s27, 0
      %p54 = por %p52, %p53
      %s55 = ssub.s32 %s21, %s28
      %p56 = scmp.eq.s32.totalorder %s55, 0
      %s58 = sadd.s32 %s57, 1
      %s59 = scalar_select %p56, %s57, %s58
      %p62 = pneg %p56
      %p63 = scmp.eq.s32.totalorder %s21, 1
      %p64 = por %p62, %p63
      %p65 = scmp.ne.s32.totalorder %s57, %s60
      %p66 = scmp.eq.s32.totalorder %s21, 0
      %p67 = por %p65, %p66
      %p68 = scmp.ne.s32.totalorder %s57, %s60
      %p69 = scmp.eq.s32.totalorder %s26, 1
      %p70 = por %p68, %p69
      %p71 = scmp.ne.s32.totalorder %s60, %s61
      %p72 = scmp.eq.s32.totalorder %s26, 0
      %p73 = por %p71, %p72
      %p74 = scmp.ne.s32.totalorder %s60, %s61
      %p75 = scmp.eq.s32.totalorder %s27, 1
      %p76 = por %p74, %p75
      %p78 = scmp.ne.s32.totalorder %s61, %s77
      %p79 = scmp.eq.s32.totalorder %s27, 0
      %p80 = por %p78, %p79
      %s82 = sadd.s32 %s81, 1
      %p85 = scmp.eq.s32.totalorder %s21, 1
      %p86 = scmp.ne.s32.totalorder %s81, %s83
      %p87 = scmp.eq.s32.totalorder %s21, 0
      %p88 = por %p86, %p87
      %p89 = scmp.ne.s32.totalorder %s81, %s83
      %p90 = scmp.eq.s32.totalorder %s26, 1
      %p91 = por %p89, %p90
      %p92 = scmp.ne.s32.totalorder %s83, %s84
      %p93 = scmp.eq.s32.totalorder %s26, 0
      %p94 = por %p92, %p93
      %p95 = scmp.ne.s32.totalorder %s83, %s84
      %p96 = scmp.eq.s32.totalorder %s27, 1
      %p97 = por %p95, %p96
      %p99 = scmp.ne.s32.totalorder %s84, %s98
      %p100 = scmp.eq.s32.totalorder %s27, 0
      %p101 = por %p99, %p100
      %s103 = sadd.s32 %s102, 1
      %p106 = scmp.eq.s32.totalorder %s21, 1
      %p107 = scmp.ne.s32.totalorder %s102, %s104
      %p108 = scmp.eq.s32.totalorder %s21, 0
      %p109 = por %p107, %p108
      %p110 = scmp.ne.s32.totalorder %s102, %s104
      %p111 = scmp.eq.s32.totalorder %s26, 1
      %p112 = por %p110, %p111
      %p113 = scmp.ne.s32.totalorder %s104, %s105
      %p114 = scmp.eq.s32.totalorder %s26, 0
      %p115 = por %p113, %p114
      %p116 = scmp.ne.s32.totalorder %s104, %s105
      %p117 = scmp.eq.s32.totalorder %s27, 1
      %p118 = por %p116, %p117
      %p120 = scmp.ne.s32.totalorder %s105, %s119
      %p121 = scmp.eq.s32.totalorder %s27, 0
      %p122 = por %p120, %p121
      %s124 = sadd.s32 %s123, 1
      %p127 = scmp.eq.s32.totalorder %s21, 1
      %p128 = scmp.ne.s32.totalorder %s123, %s125
      %p129 = scmp.eq.s32.totalorder %s21, 0
      %p130 = por %p128, %p129
      %p131 = scmp.ne.s32.totalorder %s123, %s125
      %p132 = scmp.eq.s32.totalorder %s26, 1
      %p133 = por %p131, %p132
      %p134 = scmp.ne.s32.totalorder %s125, %s126
      %p135 = scmp.eq.s32.totalorder %s26, 0
      %p136 = por %p134, %p135
      %p137 = scmp.ne.s32.totalorder %s125, %s126
      %p138 = scmp.eq.s32.totalorder %s27, 1
      %p139 = por %p137, %p138
      %p141 = scmp.ne.s32.totalorder %s126, %s140
      %p142 = scmp.eq.s32.totalorder %s27, 0
      %p143 = por %p141, %p142
      %s145 = sadd.s32 %s144, 1
      %p148 = scmp.eq.s32.totalorder %s21, 1
      %p149 = scmp.ne.s32.totalorder %s144, %s146
      %p150 = scmp.eq.s32.totalorder %s21, 0
      %p151 = por %p149, %p150
      %p152 = scmp.ne.s32.totalorder %s144, %s146
      %p153 = scmp.eq.s32.totalorder %s26, 1
      %p154 = por %p152, %p153
      %p155 = scmp.ne.s32.totalorder %s146, %s147
      %p156 = scmp.eq.s32.totalorder %s26, 0
      %p157 = por %p155, %p156
      %p158 = scmp.ne.s32.totalorder %s146, %s147
      %p159 = scmp.eq.s32.totalorder %s27, 1
      %p160 = por %p158, %p159
      %p162 = scmp.ne.s32.totalorder %s147, %s161
      %p163 = scmp.eq.s32.totalorder %s27, 0
      %p164 = por %p162, %p163
      %s166 = sadd.s32 %s165, 1
      %p169 = scmp.eq.s32.totalorder %s21, 1
      %p170 = scmp.ne.s32.totalorder %s165, %s167
      %p171 = scmp.eq.s32.totalorder %s21, 0
      %p172 = por %p170, %p171
      %p173 = scmp.ne.s32.totalorder %s165, %s167
      %p174 = scmp.eq.s32.totalorder %s26, 1
      %p175 = por %p173, %p174
      %p176 = scmp.ne.s32.totalorder %s167, %s168
      %p177 = scmp.eq.s32.totalorder %s26, 0
      %p178 = por %p176, %p177
      %p179 = scmp.ne.s32.totalorder %s167, %s168
      %p180 = scmp.eq.s32.totalorder %s27, 1
      %p181 = por %p179, %p180
      %p183 = scmp.ne.s32.totalorder %s168, %s182
      %p184 = scmp.eq.s32.totalorder %s27, 0
      %p185 = por %p183, %p184
      %s187 = sadd.s32 %s186, 1
      %p190 = scmp.eq.s32.totalorder %s21, 1
      %p191 = scmp.ne.s32.totalorder %s186, %s188
      %p192 = scmp.eq.s32.totalorder %s21, 0
      %p193 = por %p191, %p192
      %p194 = scmp.ne.s32.totalorder %s186, %s188
      %p195 = scmp.eq.s32.totalorder %s26, 1
      %p196 = por %p194, %p195
      %p197 = scmp.ne.s32.totalorder %s188, %s189
      %p198 = scmp.eq.s32.totalorder %s26, 0
      %p199 = por %p197, %p198
      %p200 = scmp.ne.s32.totalorder %s188, %s189
      %p201 = scmp.eq.s32.totalorder %s27, 1
      %p202 = por %p200, %p201
      %p204 = scmp.ne.s32.totalorder %s189, %s203
      %p205 = scmp.eq.s32.totalorder %s27, 0
      %p206 = por %p204, %p205
      %s208 = sadd.s32 %s207, 1
      %p211 = scmp.eq.s32.totalorder %s21, 1
      %p212 = scmp.ne.s32.totalorder %s207, %s209
      %p213 = scmp.eq.s32.totalorder %s21, 0
      %p214 = por %p212, %p213
      %p215 = scmp.ne.s32.totalorder %s207, %s209
      %p216 = scmp.eq.s32.totalorder %s26, 1
      %p217 = por %p215, %p216
      %p218 = scmp.ne.s32.totalorder %s209, %s210
      %p219 = scmp.eq.s32.totalorder %s26, 0
      %p220 = por %p218, %p219
      %p221 = scmp.ne.s32.totalorder %s209, %s210
      %p222 = scmp.eq.s32.totalorder %s27, 1
      %p223 = por %p221, %p222
      %p225 = scmp.ne.s32.totalorder %s210, %s224
      %p226 = scmp.eq.s32.totalorder %s27, 0
      %p227 = por %p225, %p226
      %s229 = sadd.s32 %s228, 1
      %p232 = scmp.eq.s32.totalorder %s21, 1
      %p233 = scmp.ne.s32.totalorder %s228, %s230
      %p234 = scmp.eq.s32.totalorder %s21, 0
      %p235 = por %p233, %p234
      %p236 = scmp.ne.s32.totalorder %s228, %s230
      %p237 = scmp.eq.s32.totalorder %s26, 1
      %p238 = por %p236, %p237
      %p239 = scmp.ne.s32.totalorder %s230, %s231
      %p240 = scmp.eq.s32.totalorder %s26, 0
      %p241 = por %p239, %p240
      %p242 = scmp.ne.s32.totalorder %s230, %s231
      %p243 = scmp.eq.s32.totalorder %s27, 1
      %p244 = por %p242, %p243
      %p246 = scmp.ne.s32.totalorder %s231, %s245
      %p247 = scmp.eq.s32.totalorder %s27, 0
      %p248 = por %p246, %p247
      %s250 = sadd.s32 %s249, 1
      %p253 = scmp.eq.s32.totalorder %s21, 1
      %p254 = scmp.ne.s32.totalorder %s249, %s251
      %p255 = scmp.eq.s32.totalorder %s21, 0
      %p256 = por %p254, %p255
      %p257 = scmp.ne.s32.totalorder %s249, %s251
      %p258 = scmp.eq.s32.totalorder %s26, 1
      %p259 = por %p257, %p258
      %p260 = scmp.ne.s32.totalorder %s251, %s252
      %p261 = scmp.eq.s32.totalorder %s26, 0
      %p262 = por %p260, %p261
      %p263 = scmp.ne.s32.totalorder %s251, %s252
      %p264 = scmp.eq.s32.totalorder %s27, 1
      %p265 = por %p263, %p264
      %p267 = scmp.ne.s32.totalorder %s252, %s266
      %p268 = scmp.eq.s32.totalorder %s27, 0
      %p269 = por %p267, %p268
      %s271 = sadd.s32 %s270, 1
      %p274 = scmp.eq.s32.totalorder %s21, 1
      %p275 = scmp.ne.s32.totalorder %s270, %s272
      %p276 = scmp.eq.s32.totalorder %s21, 0
      %p277 = por %p275, %p276
      %p278 = scmp.ne.s32.totalorder %s270, %s272
      %p279 = scmp.eq.s32.totalorder %s26, 1
      %p280 = por %p278, %p279
      %p281 = scmp.ne.s32.totalorder %s272, %s273
      %p282 = scmp.eq.s32.totalorder %s26, 0
      %p283 = por %p281, %p282
      %p284 = scmp.ne.s32.totalorder %s272, %s273
      %p285 = scmp.eq.s32.totalorder %s27, 1
      %p286 = por %p284, %p285
      %p288 = scmp.ne.s32.totalorder %s273, %s287
      %p289 = scmp.eq.s32.totalorder %s27, 0
      %p290 = por %p288, %p289
      %s291 = ssub.s32 %s21, %s28
      %p292 = scmp.eq.s32.totalorder %s291, 0
      %s294 = sadd.s32 %s293, 1
      %s295 = scalar_select %p292, %s293, %s294
      %p298 = pneg %p292
      %p299 = scmp.eq.s32.totalorder %s21, 1
      %p300 = por %p298, %p299
      %p301 = scmp.ne.s32.totalorder %s293, %s296
      %p302 = scmp.eq.s32.totalorder %s21, 0
      %p303 = por %p301, %p302
      %p304 = scmp.ne.s32.totalorder %s293, %s296
      %p305 = scmp.eq.s32.totalorder %s26, 1
      %p306 = por %p304, %p305
      %p307 = scmp.ne.s32.totalorder %s296, %s297
      %p308 = scmp.eq.s32.totalorder %s26, 0
      %p309 = por %p307, %p308
      %p310 = scmp.ne.s32.totalorder %s296, %s297
      %p311 = scmp.eq.s32.totalorder %s27, 1
      %p312 = por %p310, %p311
      %p314 = scmp.ne.s32.totalorder %s297, %s313
      %p315 = scmp.eq.s32.totalorder %s27, 0
      %p316 = por %p314, %p315
      %p317 = scmp.le.s32.totalorder 1, %s21
      %p318 = scmp.lt.s32.totalorder %s21, 3
      %p319 = pnand %p317, %p318
      %p320 = pneg %p319
      // Predicated region
      $region9: #{tpu_custom_call.1} parent=5 // pred_check
        _
      $region10: #{tpu_custom_call.1} parent=5 // pred_check_branch
        %322 = sbr.rel (%p319) target = $region12
      $region11: #{tpu_custom_call.1} parent=5 // pred_region
        %s323 = ssub.s32 %s21, 1
        // Predicated region
        $region13: #{tpu_custom_call.1} parent=11 // pred_check
          %p324 = pneg %p94
        $region14: #{tpu_custom_call.1} parent=11 // pred_check_branch
          %326 = sbr.rel (%p324) target = $region16
        $region15: #{tpu_custom_call.1} parent=11 // pred_region
          _
        $region16: #{tpu_custom_call.1} parent=11 // pred_fallthru
          _
        // Predicated region
        $region17: #{tpu_custom_call.1} parent=11 // pred_check
          %p327 = pneg %p115
        $region18: #{tpu_custom_call.1} parent=11 // pred_check_branch
          %329 = sbr.rel (%p327) target = $region20
        $region19: #{tpu_custom_call.1} parent=11 // pred_region
          _
        $region20: #{tpu_custom_call.1} parent=11 // pred_fallthru
          _
        // Predicated region
        $region21: #{tpu_custom_call.1} parent=11 // pred_check
          %p330 = pneg %p136
        $region22: #{tpu_custom_call.1} parent=11 // pred_check_branch
          %332 = sbr.rel (%p330) target = $region24
        $region23: #{tpu_custom_call.1} parent=11 // pred_region
          _
        $region24: #{tpu_custom_call.1} parent=11 // pred_fallthru
          _
        // Predicated region
        $region25: #{tpu_custom_call.1} parent=11 // pred_check
          %p333 = pneg %p157
        $region26: #{tpu_custom_call.1} parent=11 // pred_check_branch
          %335 = sbr.rel (%p333) target = $region28
        $region27: #{tpu_custom_call.1} parent=11 // pred_region
          _
        $region28: #{tpu_custom_call.1} parent=11 // pred_fallthru
          _
        // Predicated region
        $region29: #{tpu_custom_call.1} parent=11 // pred_check
          %p336 = pneg %p178
        $region30: #{tpu_custom_call.1} parent=11 // pred_check_branch
          %338 = sbr.rel (%p336) target = $region32
        $region31: #{tpu_custom_call.1} parent=11 // pred_region
          _
        $region32: #{tpu_custom_call.1} parent=11 // pred_fallthru
          _
        // Predicated region
        $region33: #{tpu_custom_call.1} parent=11 // pred_check
          %p339 = pneg %p199
        $region34: #{tpu_custom_call.1} parent=11 // pred_check_branch
          %341 = sbr.rel (%p339) target = $region36
        $region35: #{tpu_custom_call.1} parent=11 // pred_region
          _
        $region36: #{tpu_custom_call.1} parent=11 // pred_fallthru
          _
        // Predicated region
        $region37: #{tpu_custom_call.1} parent=11 // pred_check
          %p342 = pneg %p220
        $region38: #{tpu_custom_call.1} parent=11 // pred_check_branch
          %344 = sbr.rel (%p342) target = $region40
        $region39: #{tpu_custom_call.1} parent=11 // pred_region
          _
        $region40: #{tpu_custom_call.1} parent=11 // pred_fallthru
          _
        // Predicated region
        $region41: #{tpu_custom_call.1} parent=11 // pred_check
          %p345 = pneg %p241
        $region42: #{tpu_custom_call.1} parent=11 // pred_check_branch
          %347 = sbr.rel (%p345) target = $region44
        $region43: #{tpu_custom_call.1} parent=11 // pred_region
          _
        $region44: #{tpu_custom_call.1} parent=11 // pred_fallthru
          _
        // Predicated region
        $region45: #{tpu_custom_call.1} parent=11 // pred_check
          %p348 = pneg %p262
        $region46: #{tpu_custom_call.1} parent=11 // pred_check_branch
          %350 = sbr.rel (%p348) target = $region48
        $region47: #{tpu_custom_call.1} parent=11 // pred_region
          _
        $region48: #{tpu_custom_call.1} parent=11 // pred_fallthru
          _
        // Predicated region
        $region49: #{tpu_custom_call.1} parent=11 // pred_check
          %p351 = pneg %p283
        $region50: #{tpu_custom_call.1} parent=11 // pred_check_branch
          %353 = sbr.rel (%p351) target = $region52
        $region51: #{tpu_custom_call.1} parent=11 // pred_region
          _
        $region52: #{tpu_custom_call.1} parent=11 // pred_fallthru
          _
      $region12: #{tpu_custom_call.1} parent=5 // pred_fallthru
        _
      %p354 = scmp.lt.s32.totalorder %s21, 2
      // Predicated region
      $region53: #{tpu_custom_call.1} parent=5 // pred_check
        %p355 = pneg %p354
      $region54: #{tpu_custom_call.1} parent=5 // pred_check_branch
        %357 = sbr.rel (%p355) target = $region56
      $region55: #{tpu_custom_call.1} parent=5 // pred_region
        // Predicated region
        $region57: #{tpu_custom_call.1} parent=55 // pred_check
          %p358 = pneg %p41
        $region58: #{tpu_custom_call.1} parent=55 // pred_check_branch
          %360 = sbr.rel (%p358) target = $region60
        $region59: #{tpu_custom_call.1} parent=55 // pred_region
          %p361 = scmp.lt.s32.totalorder %s21, 1
          %s362 = scalar_select %p361, %s21, 1
          %s363 = scalar_lea.vmem %s0, %s362
        $region60: #{tpu_custom_call.1} parent=55 // pred_fallthru
          _
        // Predicated region
        $region61: #{tpu_custom_call.1} parent=55 // pred_check
          %p364 = pneg %p67
        $region62: #{tpu_custom_call.1} parent=55 // pred_check_branch
          %366 = sbr.rel (%p364) target = $region64
        $region63: #{tpu_custom_call.1} parent=55 // pred_region
          %p367 = scmp.lt.s32.totalorder %s21, 1
          %s368 = scalar_select %p367, %s21, 1
          %s369 = smul.addr %s368, 8
          %s370 = scalar_lea.vmem %s1, %s369
        $region64: #{tpu_custom_call.1} parent=55 // pred_fallthru
          _
      $region56: #{tpu_custom_call.1} parent=5 // pred_fallthru
        _
      %p371 = scmp.le.s32.totalorder 1, %s21
      %p372 = scmp.lt.s32.totalorder %s21, 3
      %p373 = pnand %p371, %p372
      %p374 = pneg %p373
      // Predicated region
      $region65: #{tpu_custom_call.1} parent=5 // pred_check
        _
      $region66: #{tpu_custom_call.1} parent=5 // pred_check_branch
        %376 = sbr.rel (%p373) target = $region68
      $region67: #{tpu_custom_call.1} parent=5 // pred_region
        %s377 = ssub.s32 %s21, 1
        %p378 = scmp.lt.s32.totalorder %s26, 1
        %s379 = scalar_select %p378, %s26, 1
        %s380 = scalar_lea.vmem %s0, %s379
        %p381 = pneg %p47
        %p382 = pneg %p44
        %p383 = scmp.lt.s32.totalorder %s26, 1
        %s384 = scalar_select %p383, %s26, 1
        %s385 = smul.addr %s384, 8
        %s386 = scalar_lea.vmem %s1, %s385
        %p387 = pneg %p73
        %p388 = pneg %p70
        %p389 = pneg %p94
        %p390 = pneg %p91
        %p391 = pneg %p115
        %p392 = pneg %p112
        %p393 = pneg %p136
        %p394 = pneg %p133
        %p395 = pneg %p157
        %p396 = pneg %p154
        %p397 = pneg %p178
        %p398 = pneg %p175
        %p399 = pneg %p199
        %p400 = pneg %p196
        %p401 = pneg %p220
        %p402 = pneg %p217
        %p403 = pneg %p241
        %p404 = pneg %p238
        %p405 = pneg %p262
        %p406 = pneg %p259
        %p407 = pneg %p283
        %p408 = pneg %p280
        %p409 = pneg %p309
        %p410 = pneg %p306
        %s411 = sand.u32 %s296, 1
        %s412 = scalar_lea.sflag [#allocation3], %s411
        %s413 = sand.u32 %s296, 1
        %s414 = smul.addr %s413, 8
        %s415 = scalar_lea.vmem [#allocation2], %s414
        %p416 = scmp.lt.s32.totalorder %s26, 1
        %s417 = scalar_select %p416, %s26, 1
        %s418 = scalar_lea.vmem %s0, %s417
        %p419 = scmp.lt.s32.totalorder %s26, 1
        %s420 = scalar_select %p419, %s26, 1
        %s421 = smul.addr %s420, 8
        %s422 = scalar_lea.vmem %s1, %s421
        %v423 = vld [vmem:[%s418] sm:$0x1]
        %v424 = vld [vmem:[%s422] sm:$0xff]
        %425 = vrot.lane.b32.xlu0 %v424, 124
        %v426 = vpop.permute.xlu0 %425
        %v427 = vld [vmem:[%s2] sm:$0xff]
        %v428 = vld [vmem:[%s2 + $0x8] sm:$0xff]
        %v429 = vld [vmem:[%s2 + $0x10] sm:$0xff]
        %v430 = vld [vmem:[%s2 + $0x18] sm:$0xff]
        %431 = vrot.lane.b32.xlu0 %v423, 124
        %v432 = vpop.permute.xlu0 %431
        %434 = vset.pattern.permute.xlu0 0
        %435 = vperm.xlu0 %434, %v427
        %v436 = vpop.permute.xlu0 %435
        %439 = vset.pattern.permute.xlu0 0
        %440 = vperm.xlu0 %439, %v428
        %v441 = vpop.permute.xlu0 %440
        %444 = vset.pattern.permute.xlu0 0
        %445 = vperm.xlu0 %444, %v429
        %v446 = vpop.permute.xlu0 %445
        %449 = vset.pattern.permute.xlu0 0
        %450 = vperm.xlu0 %449, %v430
        %v451 = vpop.permute.xlu0 %450
        %v454 = vperm.slane %v423, 0
        %v456 = vmul.f32 %v436, %v454
        %v457 = vmul.f32 %v441, %v454
        %v458 = vmul.f32 %v446, %v454
        %v459 = vmul.f32 %v451, %v454
        %460 = vset.pattern.permute.xlu0 1
        %461 = vperm.xlu0 %460, %v427
        %v462 = vpop.permute.xlu0 %461
        %464 = vset.pattern.permute.xlu0 1
        %465 = vperm.xlu0 %464, %v428
        %v466 = vpop.permute.xlu0 %465
        %468 = vset.pattern.permute.xlu0 1
        %469 = vperm.xlu0 %468, %v429
        %v470 = vpop.permute.xlu0 %469
        %472 = vset.pattern.permute.xlu0 1
        %473 = vperm.xlu0 %472, %v430
        %v474 = vpop.permute.xlu0 %473
        %v476 = vperm.slane %v432, 0
        %v477 = vmul.f32 %v462, %v476
        %v478 = vmul.f32 %v466, %v476
        %v479 = vmul.f32 %v470, %v476
        %v480 = vmul.f32 %v474, %v476
        %v481 = vadd.f32 %v456, %v477
        %v482 = vadd.f32 %v457, %v478
        %v483 = vadd.f32 %v458, %v479
        %v484 = vadd.f32 %v459, %v480
        %v485 = vld [vmem:[%s5] sm:$0xff]
        %v486 = vld [vmem:[%s5 + $0x8] sm:$0xff]
        %v487 = vld [vmem:[%s5 + $0x10] sm:$0xff]
        %v488 = vld [vmem:[%s5 + $0x18] sm:$0xff]
        %vm489 = vcmask 64512
        %v491 = vsel %vm489, %v485, 0
        %v494 = vsel %vm489, %v486, 0
        %v497 = vsel %vm489, %v487, 0
        %v500 = vsel %vm489, %v488, 0
        %502 = vmatpush.msra.mxu0 0.0
        %503 = vmatpush.msra.mxu0 0.0
        %504 = vmatpush.msra.mxu0 0.0
        %505 = vmatpush.msra.mxu0 0.0
        %506 = vmatpush.msra.mxu0 0.0
        %507 = vmatpush.msra.mxu0 0.0
        %508 = vmatpush.msra.mxu0 0.0
        %509 = vmatpush.msra.mxu0 0.0
        %510 = vmatpush.msra.mxu0 0.0
        %511 = vmatpush.msra.mxu0 0.0
        %512 = vmatpush.msra.mxu0 0.0
        %513 = vmatpush.msra.mxu0 0.0
        %514 = vmatpush.msra.mxu0 0.0
        %515 = vmatpush.msra.mxu0 0.0
        %516 = vmatpush.msra.mxu0 0.0
        %517 = vmatpush.msra.mxu0 %v424
        %518 = vmatmul.f32.gmra.mxu0 %v491
        %v519 = vpop.f32.mrf.mxu0
        %v520 = vadd.f32 0.0, %v519
        %521 = vmatmul.f32.gmra.mxu0 %v494
        %v522 = vpop.f32.mrf.mxu0
        %v523 = vadd.f32 0.0, %v522
        %524 = vmatmul.f32.gmra.mxu0 %v497
        %v525 = vpop.f32.mrf.mxu0
        %v526 = vadd.f32 0.0, %v525
        %527 = vmatmul.f32.gmra.mxu0 %v500
        %v528 = vpop.f32.mrf.mxu0
        %v529 = vadd.f32 0.0, %v528
        %530 = vdwg.mxu0
        %v531 = vadd.f32 %v481, %v520
        %v532 = vadd.f32 %v482, %v523
        %v533 = vadd.f32 %v483, %v526
        %v534 = vadd.f32 %v484, %v529
        %v535 = vld [vmem:[%s6] sm:$0xff]
        %v536 = vld [vmem:[%s6 + $0x8] sm:$0xff]
        %v537 = vld [vmem:[%s6 + $0x10] sm:$0xff]
        %v538 = vld [vmem:[%s6 + $0x18] sm:$0xff]
        %v540 = vsel %vm489, %v535, 0
        %v543 = vsel %vm489, %v536, 0
        %v546 = vsel %vm489, %v537, 0
        %v549 = vsel %vm489, %v538, 0
        %551 = vmatpush.msra.mxu0 0.0
        %552 = vmatpush.msra.mxu0 0.0
        %553 = vmatpush.msra.mxu0 0.0
        %554 = vmatpush.msra.mxu0 0.0
        %555 = vmatpush.msra.mxu0 0.0
        %556 = vmatpush.msra.mxu0 0.0
        %557 = vmatpush.msra.mxu0 0.0
        %558 = vmatpush.msra.mxu0 0.0
        %559 = vmatpush.msra.mxu0 0.0
        %560 = vmatpush.msra.mxu0 0.0
        %561 = vmatpush.msra.mxu0 0.0
        %562 = vmatpush.msra.mxu0 0.0
        %563 = vmatpush.msra.mxu0 0.0
        %564 = vmatpush.msra.mxu0 0.0
        %565 = vmatpush.msra.mxu0 0.0
        %566 = vmatpush.msra.mxu0 %v426
        %567 = vmatmul.f32.gmra.mxu0 %v540
        %v568 = vpop.f32.mrf.mxu0
        %v569 = vadd.f32 0.0, %v568
        %570 = vmatmul.f32.gmra.mxu0 %v543
        %v571 = vpop.f32.mrf.mxu0
        %v572 = vadd.f32 0.0, %v571
        %573 = vmatmul.f32.gmra.mxu0 %v546
        %v574 = vpop.f32.mrf.mxu0
        %v575 = vadd.f32 0.0, %v574
        %576 = vmatmul.f32.gmra.mxu0 %v549
        %v577 = vpop.f32.mrf.mxu0
        %v578 = vadd.f32 0.0, %v577
        %579 = vdwg.mxu0
        %v580 = vadd.f32 %v531, %v569
        %v581 = vadd.f32 %v532, %v572
        %v582 = vadd.f32 %v533, %v575
        %v583 = vadd.f32 %v534, %v578
        %v584 = vld [vmem:[%s7] sm:$0xff]
        %v585 = vld [vmem:[%s7 + $0x8] sm:$0xff]
        %v586 = vld [vmem:[%s7 + $0x10] sm:$0xff]
        %v587 = vld [vmem:[%s7 + $0x18] sm:$0xff]
        %589 = vset.pattern.permute.xlu0 0
        %590 = vperm.xlu0 %589, %v584
        %v591 = vpop.permute.xlu0 %590
        %594 = vset.pattern.permute.xlu0 0
        %595 = vperm.xlu0 %594, %v585
        %v596 = vpop.permute.xlu0 %595
        %599 = vset.pattern.permute.xlu0 0
        %600 = vperm.xlu0 %599, %v586
        %v601 = vpop.permute.xlu0 %600
        %604 = vset.pattern.permute.xlu0 0
        %605 = vperm.xlu0 %604, %v587
        %v606 = vpop.permute.xlu0 %605
        %v608 = vadd.f32 %v580, %v591
        %v609 = vadd.f32 %v581, %v596
        %v610 = vadd.f32 %v582, %v601
        %v611 = vadd.f32 %v583, %v606
        %v612 = vmax.f32 %v608, 0.0
        %v613 = vmax.f32 %v609, 0.0
        %v614 = vmax.f32 %v610, 0.0
        %v615 = vmax.f32 %v611, 0.0
        %v616 = vld [vmem:[%s8] sm:$0xff]
        %v617 = vld [vmem:[%s8 + $0x8] sm:$0xff]
        %v618 = vld [vmem:[%s8 + $0x10] sm:$0xff]
        %v619 = vld [vmem:[%s8 + $0x18] sm:$0xff]
        %v620 = vld [vmem:[%s9] sm:$0xff]
        %v621 = vld [vmem:[%s9 + $0x8] sm:$0xff]
        %v622 = vld [vmem:[%s9 + $0x10] sm:$0xff]
        %v623 = vld [vmem:[%s9 + $0x18] sm:$0xff]
        %625 = vset.pattern.permute.xlu0 0
        %626 = vperm.xlu0 %625, %v620
        %v627 = vpop.permute.xlu0 %626
        %630 = vset.pattern.permute.xlu0 0
        %631 = vperm.xlu0 %630, %v621
        %v632 = vpop.permute.xlu0 %631
        %635 = vset.pattern.permute.xlu0 0
        %636 = vperm.xlu0 %635, %v622
        %v637 = vpop.permute.xlu0 %636
        %640 = vset.pattern.permute.xlu0 0
        %641 = vperm.xlu0 %640, %v623
        %v642 = vpop.permute.xlu0 %641
        %vm644 = vcmask 261120
        %v646 = vsel %vm644, %v616, 0
        %v649 = vsel %vm644, %v617, 0
        %v652 = vsel %vm644, %v618, 0
        %v655 = vsel %vm644, %v619, 0
        %657 = vmatpush.msra.mxu0 0.0
        %658 = vmatpush.msra.mxu0 0.0
        %659 = vmatpush.msra.mxu0 0.0
        %660 = vmatpush.msra.mxu0 0.0
        %661 = vmatpush.msra.mxu0 0.0
        %662 = vmatpush.msra.mxu0 0.0
        %663 = vmatpush.msra.mxu0 0.0
        %664 = vmatpush.msra.mxu0 0.0
        %665 = vmatpush.msra.mxu0 0.0
        %666 = vmatpush.msra.mxu0 0.0
        %667 = vmatpush.msra.mxu0 0.0
        %668 = vmatpush.msra.mxu0 0.0
        %669 = vmatpush.msra.mxu0 %v615
        %670 = vmatpush.msra.mxu0 %v614
        %671 = vmatpush.msra.mxu0 %v613
        %672 = vmatpush.msra.mxu0 %v612
        %673 = vmatmul.f32.gmra.mxu0 %v646
        %v674 = vpop.f32.mrf.mxu0
        %v675 = vadd.f32 %v627, %v674
        %676 = vmatmul.f32.gmra.mxu0 %v649
        %v677 = vpop.f32.mrf.mxu0
        %v678 = vadd.f32 %v632, %v677
        %679 = vmatmul.f32.gmra.mxu0 %v652
        %v680 = vpop.f32.mrf.mxu0
        %v681 = vadd.f32 %v637, %v680
        %682 = vmatmul.f32.gmra.mxu0 %v655
        %v683 = vpop.f32.mrf.mxu0
        %v684 = vadd.f32 %v642, %v683
        %685 = vdwg.mxu0
        %v686 = vmax.f32 %v675, 0.0
        %v687 = vmax.f32 %v678, 0.0
        %v688 = vmax.f32 %v681, 0.0
        %v689 = vmax.f32 %v684, 0.0
        %690 = vrot.lane.b32.xlu0 %v426, 126
        %v691 = vpop.permute.xlu0 %690
        %692 = vrot.lane.b32.xlu0 %v686, 126
        %v693 = vpop.permute.xlu0 %692
        %694 = vrot.lane.b32.xlu0 %v687, 126
        %v695 = vpop.permute.xlu0 %694
        %696 = vrot.lane.b32.xlu0 %v688, 126
        %v697 = vpop.permute.xlu0 %696
        %698 = vrot.lane.b32.xlu0 %v689, 126
        %v699 = vpop.permute.xlu0 %698
        %v700 = vld [vmem:[%s3] sm:$0xff]
        %v701 = vld [vmem:[%s3 + $0x8] sm:$0xff]
        %v702 = vld [vmem:[%s3 + $0x10] sm:$0xff]
        %v703 = vld [vmem:[%s3 + $0x18] sm:$0xff]
        %v704 = vld [vmem:[%s4] sm:$0xff]
        %v705 = vld [vmem:[%s4 + $0x8] sm:$0xff]
        %v706 = vld [vmem:[%s4 + $0x10] sm:$0xff]
        %v707 = vld [vmem:[%s4 + $0x18] sm:$0xff]
        %v709 = vsel %vm644, %v704, 0
        %v712 = vsel %vm644, %v705, 0
        %v715 = vsel %vm644, %v706, 0
        %v718 = vsel %vm644, %v707, 0
        %720 = vmatpush.msra.mxu0 0.0
        %721 = vmatpush.msra.mxu0 0.0
        %722 = vmatpush.msra.mxu0 0.0
        %723 = vmatpush.msra.mxu0 0.0
        %724 = vmatpush.msra.mxu0 0.0
        %725 = vmatpush.msra.mxu0 0.0
        %726 = vmatpush.msra.mxu0 0.0
        %727 = vmatpush.msra.mxu0 0.0
        %728 = vmatpush.msra.mxu0 0.0
        %729 = vmatpush.msra.mxu0 0.0
        %730 = vmatpush.msra.mxu0 0.0
        %731 = vmatpush.msra.mxu0 0.0
        %732 = vmatpush.msra.mxu0 %v699
        %733 = vmatpush.msra.mxu0 %v697
        %734 = vmatpush.msra.mxu0 %v695
        %735 = vmatpush.msra.mxu0 %v693
        %736 = vmatmul.f32.gmra.mxu0 %v709
        %v737 = vpop.f32.mrf.mxu0
        %v738 = vadd.f32 0.0, %v737
        %739 = vmatmul.f32.gmra.mxu0 %v712
        %v740 = vpop.f32.mrf.mxu0
        %v741 = vadd.f32 0.0, %v740
        %742 = vmatmul.f32.gmra.mxu0 %v715
        %v743 = vpop.f32.mrf.mxu0
        %v744 = vadd.f32 0.0, %v743
        %745 = vmatmul.f32.gmra.mxu0 %v718
        %v746 = vpop.f32.mrf.mxu0
        %v747 = vadd.f32 0.0, %v746
        %748 = vdwg.mxu0
        %v750 = vsel %vm644, %v700, 0
        %v753 = vsel %vm644, %v701, 0
        %v756 = vsel %vm644, %v702, 0
        %v759 = vsel %vm644, %v703, 0
        %761 = vmatpush.msra.mxu0 0.0
        %762 = vmatpush.msra.mxu0 0.0
        %763 = vmatpush.msra.mxu0 0.0
        %764 = vmatpush.msra.mxu0 0.0
        %765 = vmatpush.msra.mxu0 0.0
        %766 = vmatpush.msra.mxu0 0.0
        %767 = vmatpush.msra.mxu0 0.0
        %768 = vmatpush.msra.mxu0 0.0
        %769 = vmatpush.msra.mxu0 0.0
        %770 = vmatpush.msra.mxu0 0.0
        %771 = vmatpush.msra.mxu0 0.0
        %772 = vmatpush.msra.mxu0 0.0
        %773 = vmatpush.msra.mxu0 %v689
        %774 = vmatpush.msra.mxu0 %v688
        %775 = vmatpush.msra.mxu0 %v687
        %776 = vmatpush.msra.mxu0 %v686
        %777 = vmatmul.f32.gmra.mxu0 %v750
        %v778 = vpop.f32.mrf.mxu0
        %v779 = vadd.f32 %v738, %v778
        %780 = vmatmul.f32.gmra.mxu0 %v753
        %v781 = vpop.f32.mrf.mxu0
        %v782 = vadd.f32 %v741, %v781
        %783 = vmatmul.f32.gmra.mxu0 %v756
        %v784 = vpop.f32.mrf.mxu0
        %v785 = vadd.f32 %v744, %v784
        %786 = vmatmul.f32.gmra.mxu0 %v759
        %v787 = vpop.f32.mrf.mxu0
        %v788 = vadd.f32 %v747, %v787
        %789 = vdwg.mxu0
        %s790 = scalar_lea.vmem %s5, 32
        %v791 = vld [vmem:[%s790] sm:$0xff]
        %v792 = vld [vmem:[%s790 + $0x8] sm:$0xff]
        %v793 = vld [vmem:[%s790 + $0x10] sm:$0xff]
        %v794 = vld [vmem:[%s790 + $0x18] sm:$0xff]
        %v796 = vsel %vm489, %v791, 0
        %v799 = vsel %vm489, %v792, 0
        %v802 = vsel %vm489, %v793, 0
        %v805 = vsel %vm489, %v794, 0
        %807 = vmatpush.msra.mxu0 0.0
        %808 = vmatpush.msra.mxu0 0.0
        %809 = vmatpush.msra.mxu0 0.0
        %810 = vmatpush.msra.mxu0 0.0
        %811 = vmatpush.msra.mxu0 0.0
        %812 = vmatpush.msra.mxu0 0.0
        %813 = vmatpush.msra.mxu0 0.0
        %814 = vmatpush.msra.mxu0 0.0
        %815 = vmatpush.msra.mxu0 0.0
        %816 = vmatpush.msra.mxu0 0.0
        %817 = vmatpush.msra.mxu0 0.0
        %818 = vmatpush.msra.mxu0 0.0
        %819 = vmatpush.msra.mxu0 0.0
        %820 = vmatpush.msra.mxu0 0.0
        %821 = vmatpush.msra.mxu0 0.0
        %822 = vmatpush.msra.mxu0 %v426
        %823 = vmatmul.f32.gmra.mxu0 %v796
        %v824 = vpop.f32.mrf.mxu0
        %v825 = vadd.f32 0.0, %v824
        %826 = vmatmul.f32.gmra.mxu0 %v799
        %v827 = vpop.f32.mrf.mxu0
        %v828 = vadd.f32 0.0, %v827
        %829 = vmatmul.f32.gmra.mxu0 %v802
        %v830 = vpop.f32.mrf.mxu0
        %v831 = vadd.f32 0.0, %v830
        %832 = vmatmul.f32.gmra.mxu0 %v805
        %v833 = vpop.f32.mrf.mxu0
        %v834 = vadd.f32 0.0, %v833
        %835 = vdwg.mxu0
        %v836 = vadd.f32 %v779, %v825
        %v837 = vadd.f32 %v782, %v828
        %v838 = vadd.f32 %v785, %v831
        %v839 = vadd.f32 %v788, %v834
        %s840 = scalar_lea.vmem %s6, 32
        %v841 = vld [vmem:[%s840] sm:$0xff]
        %v842 = vld [vmem:[%s840 + $0x8] sm:$0xff]
        %v843 = vld [vmem:[%s840 + $0x10] sm:$0xff]
        %v844 = vld [vmem:[%s840 + $0x18] sm:$0xff]
        %v846 = vsel %vm489, %v841, 0
        %v849 = vsel %vm489, %v842, 0
        %v852 = vsel %vm489, %v843, 0
        %v855 = vsel %vm489, %v844, 0
        %857 = vmatpush.msra.mxu0 0.0
        %858 = vmatpush.msra.mxu0 0.0
        %859 = vmatpush.msra.mxu0 0.0
        %860 = vmatpush.msra.mxu0 0.0
        %861 = vmatpush.msra.mxu0 0.0
        %862 = vmatpush.msra.mxu0 0.0
        %863 = vmatpush.msra.mxu0 0.0
        %864 = vmatpush.msra.mxu0 0.0
        %865 = vmatpush.msra.mxu0 0.0
        %866 = vmatpush.msra.mxu0 0.0
        %867 = vmatpush.msra.mxu0 0.0
        %868 = vmatpush.msra.mxu0 0.0
        %869 = vmatpush.msra.mxu0 0.0
        %870 = vmatpush.msra.mxu0 0.0
        %871 = vmatpush.msra.mxu0 0.0
        %872 = vmatpush.msra.mxu0 %v691
        %873 = vmatmul.f32.gmra.mxu0 %v846
        %v874 = vpop.f32.mrf.mxu0
        %v875 = vadd.f32 0.0, %v874
        %876 = vmatmul.f32.gmra.mxu0 %v849
        %v877 = vpop.f32.mrf.mxu0
        %v878 = vadd.f32 0.0, %v877
        %879 = vmatmul.f32.gmra.mxu0 %v852
        %v880 = vpop.f32.mrf.mxu0
        %v881 = vadd.f32 0.0, %v880
        %882 = vmatmul.f32.gmra.mxu0 %v855
        %v883 = vpop.f32.mrf.mxu0
        %v884 = vadd.f32 0.0, %v883
        %885 = vdwg.mxu0
        %v886 = vadd.f32 %v836, %v875
        %v887 = vadd.f32 %v837, %v878
        %v888 = vadd.f32 %v838, %v881
        %v889 = vadd.f32 %v839, %v884
        %s890 = scalar_lea.vmem %s7, 32
        %v891 = vld [vmem:[%s890] sm:$0xff]
        %v892 = vld [vmem:[%s890 + $0x8] sm:$0xff]
        %v893 = vld [vmem:[%s890 + $0x10] sm:$0xff]
        %v894 = vld [vmem:[%s890 + $0x18] sm:$0xff]
        %896 = vset.pattern.permute.xlu0 0
        %897 = vperm.xlu0 %896, %v891
        %v898 = vpop.permute.xlu0 %897
        %901 = vset.pattern.permute.xlu0 0
        %902 = vperm.xlu0 %901, %v892
        %v903 = vpop.permute.xlu0 %902
        %906 = vset.pattern.permute.xlu0 0
        %907 = vperm.xlu0 %906, %v893
        %v908 = vpop.permute.xlu0 %907
        %911 = vset.pattern.permute.xlu0 0
        %912 = vperm.xlu0 %911, %v894
        %v913 = vpop.permute.xlu0 %912
        %v915 = vadd.f32 %v886, %v898
        %v916 = vadd.f32 %v887, %v903
        %v917 = vadd.f32 %v888, %v908
        %v918 = vadd.f32 %v889, %v913
        %v919 = vmax.f32 %v915, 0.0
        %v920 = vmax.f32 %v916, 0.0
        %v921 = vmax.f32 %v917, 0.0
        %v922 = vmax.f32 %v918, 0.0
        %s923 = scalar_lea.vmem %s8, 32
        %v924 = vld [vmem:[%s923] sm:$0xff]
        %v925 = vld [vmem:[%s923 + $0x8] sm:$0xff]
        %v926 = vld [vmem:[%s923 + $0x10] sm:$0xff]
        %v927 = vld [vmem:[%s923 + $0x18] sm:$0xff]
        %s928 = scalar_lea.vmem %s9, 32
        %v929 = vld [vmem:[%s928] sm:$0xff]
        %v930 = vld [vmem:[%s928 + $0x8] sm:$0xff]
        %v931 = vld [vmem:[%s928 + $0x10] sm:$0xff]
        %v932 = vld [vmem:[%s928 + $0x18] sm:$0xff]
        %934 = vset.pattern.permute.xlu0 0
        %935 = vperm.xlu0 %934, %v929
        %v936 = vpop.permute.xlu0 %935
        %939 = vset.pattern.permute.xlu0 0
        %940 = vperm.xlu0 %939, %v930
        %v941 = vpop.permute.xlu0 %940
        %944 = vset.pattern.permute.xlu0 0
        %945 = vperm.xlu0 %944, %v931
        %v946 = vpop.permute.xlu0 %945
        %949 = vset.pattern.permute.xlu0 0
        %950 = vperm.xlu0 %949, %v932
        %v951 = vpop.permute.xlu0 %950
        %v954 = vsel %vm644, %v924, 0
        %v957 = vsel %vm644, %v925, 0
        %v960 = vsel %vm644, %v926, 0
        %v963 = vsel %vm644, %v927, 0
        %965 = vmatpush.msra.mxu0 0.0
        %966 = vmatpush.msra.mxu0 0.0
        %967 = vmatpush.msra.mxu0 0.0
        %968 = vmatpush.msra.mxu0 0.0
        %969 = vmatpush.msra.mxu0 0.0
        %970 = vmatpush.msra.mxu0 0.0
        %971 = vmatpush.msra.mxu0 0.0
        %972 = vmatpush.msra.mxu0 0.0
        %973 = vmatpush.msra.mxu0 0.0
        %974 = vmatpush.msra.mxu0 0.0
        %975 = vmatpush.msra.mxu0 0.0
        %976 = vmatpush.msra.mxu0 0.0
        %977 = vmatpush.msra.mxu0 %v922
        %978 = vmatpush.msra.mxu0 %v921
        %979 = vmatpush.msra.mxu0 %v920
        %980 = vmatpush.msra.mxu0 %v919
        %981 = vmatmul.f32.gmra.mxu0 %v954
        %v982 = vpop.f32.mrf.mxu0
        %v983 = vadd.f32 %v936, %v982
        %984 = vmatmul.f32.gmra.mxu0 %v957
        %v985 = vpop.f32.mrf.mxu0
        %v986 = vadd.f32 %v941, %v985
        %987 = vmatmul.f32.gmra.mxu0 %v960
        %v988 = vpop.f32.mrf.mxu0
        %v989 = vadd.f32 %v946, %v988
        %990 = vmatmul.f32.gmra.mxu0 %v963
        %v991 = vpop.f32.mrf.mxu0
        %v992 = vadd.f32 %v951, %v991
        %993 = vdwg.mxu0
        %v994 = vmax.f32 %v983, 0.0
        %v995 = vmax.f32 %v986, 0.0
        %v996 = vmax.f32 %v989, 0.0
        %v997 = vmax.f32 %v992, 0.0
        %998 = vrot.lane.b32.xlu0 %v691, 127
        %v999 = vpop.permute.xlu0 %998
        %1000 = vrot.lane.b32.xlu0 %v994, 127
        %v1001 = vpop.permute.xlu0 %1000
        %1002 = vrot.lane.b32.xlu0 %v995, 127
        %v1003 = vpop.permute.xlu0 %1002
        %1004 = vrot.lane.b32.xlu0 %v996, 127
        %v1005 = vpop.permute.xlu0 %1004
        %1006 = vrot.lane.b32.xlu0 %v997, 127
        %v1007 = vpop.permute.xlu0 %1006
        %s1008 = scalar_lea.vmem %s3, 32
        %v1009 = vld [vmem:[%s1008] sm:$0xff]
        %v1010 = vld [vmem:[%s1008 + $0x8] sm:$0xff]
        %v1011 = vld [vmem:[%s1008 + $0x10] sm:$0xff]
        %v1012 = vld [vmem:[%s1008 + $0x18] sm:$0xff]
        %s1013 = scalar_lea.vmem %s4, 32
        %v1014 = vld [vmem:[%s1013] sm:$0xff]
        %v1015 = vld [vmem:[%s1013 + $0x8] sm:$0xff]
        %v1016 = vld [vmem:[%s1013 + $0x10] sm:$0xff]
        %v1017 = vld [vmem:[%s1013 + $0x18] sm:$0xff]
        %v1019 = vsel %vm644, %v1014, 0
        %v1022 = vsel %vm644, %v1015, 0
        %v1025 = vsel %vm644, %v1016, 0
        %v1028 = vsel %vm644, %v1017, 0
        %1030 = vmatpush.msra.mxu0 0.0
        %1031 = vmatpush.msra.mxu0 0.0
        %1032 = vmatpush.msra.mxu0 0.0
        %1033 = vmatpush.msra.mxu0 0.0
        %1034 = vmatpush.msra.mxu0 0.0
        %1035 = vmatpush.msra.mxu0 0.0
        %1036 = vmatpush.msra.mxu0 0.0
        %1037 = vmatpush.msra.mxu0 0.0
        %1038 = vmatpush.msra.mxu0 0.0
        %1039 = vmatpush.msra.mxu0 0.0
        %1040 = vmatpush.msra.mxu0 0.0
        %1041 = vmatpush.msra.mxu0 0.0
        %1042 = vmatpush.msra.mxu0 %v1007
        %1043 = vmatpush.msra.mxu0 %v1005
        %1044 = vmatpush.msra.mxu0 %v1003
        %1045 = vmatpush.msra.mxu0 %v1001
        %1046 = vmatmul.f32.gmra.mxu0 %v1019
        %v1047 = vpop.f32.mrf.mxu0
        %v1048 = vadd.f32 0.0, %v1047
        %1049 = vmatmul.f32.gmra.mxu0 %v1022
        %v1050 = vpop.f32.mrf.mxu0
        %v1051 = vadd.f32 0.0, %v1050
        %1052 = vmatmul.f32.gmra.mxu0 %v1025
        %v1053 = vpop.f32.mrf.mxu0
        %v1054 = vadd.f32 0.0, %v1053
        %1055 = vmatmul.f32.gmra.mxu0 %v1028
        %v1056 = vpop.f32.mrf.mxu0
        %v1057 = vadd.f32 0.0, %v1056
        %1058 = vdwg.mxu0
        %v1060 = vsel %vm644, %v1009, 0
        %v1063 = vsel %vm644, %v1010, 0
        %v1066 = vsel %vm644, %v1011, 0
        %v1069 = vsel %vm644, %v1012, 0
        %1071 = vmatpush.msra.mxu0 0.0
        %1072 = vmatpush.msra.mxu0 0.0
        %1073 = vmatpush.msra.mxu0 0.0
        %1074 = vmatpush.msra.mxu0 0.0
        %1075 = vmatpush.msra.mxu0 0.0
        %1076 = vmatpush.msra.mxu0 0.0
        %1077 = vmatpush.msra.mxu0 0.0
        %1078 = vmatpush.msra.mxu0 0.0
        %1079 = vmatpush.msra.mxu0 0.0
        %1080 = vmatpush.msra.mxu0 0.0
        %1081 = vmatpush.msra.mxu0 0.0
        %1082 = vmatpush.msra.mxu0 0.0
        %1083 = vmatpush.msra.mxu0 %v997
        %1084 = vmatpush.msra.mxu0 %v996
        %1085 = vmatpush.msra.mxu0 %v995
        %1086 = vmatpush.msra.mxu0 %v994
        %1087 = vmatmul.f32.gmra.mxu0 %v1060
        %v1088 = vpop.f32.mrf.mxu0
        %v1089 = vadd.f32 %v1048, %v1088
        %1090 = vmatmul.f32.gmra.mxu0 %v1063
        %v1091 = vpop.f32.mrf.mxu0
        %v1092 = vadd.f32 %v1051, %v1091
        %1093 = vmatmul.f32.gmra.mxu0 %v1066
        %v1094 = vpop.f32.mrf.mxu0
        %v1095 = vadd.f32 %v1054, %v1094
        %1096 = vmatmul.f32.gmra.mxu0 %v1069
        %v1097 = vpop.f32.mrf.mxu0
        %v1098 = vadd.f32 %v1057, %v1097
        %1099 = vdwg.mxu0
        %s1100 = scalar_lea.vmem %s5, 64
        %v1101 = vld [vmem:[%s1100] sm:$0xff]
        %v1102 = vld [vmem:[%s1100 + $0x8] sm:$0xff]
        %v1103 = vld [vmem:[%s1100 + $0x10] sm:$0xff]
        %v1104 = vld [vmem:[%s1100 + $0x18] sm:$0xff]
        %v1106 = vsel %vm489, %v1101, 0
        %v1109 = vsel %vm489, %v1102, 0
        %v1112 = vsel %vm489, %v1103, 0
        %v1115 = vsel %vm489, %v1104, 0
        %1117 = vmatpush.msra.mxu0 0.0
        %1118 = vmatpush.msra.mxu0 0.0
        %1119 = vmatpush.msra.mxu0 0.0
        %1120 = vmatpush.msra.mxu0 0.0
        %1121 = vmatpush.msra.mxu0 0.0
        %1122 = vmatpush.msra.mxu0 0.0
        %1123 = vmatpush.msra.mxu0 0.0
        %1124 = vmatpush.msra.mxu0 0.0
        %1125 = vmatpush.msra.mxu0 0.0
        %1126 = vmatpush.msra.mxu0 0.0
        %1127 = vmatpush.msra.mxu0 0.0
        %1128 = vmatpush.msra.mxu0 0.0
        %1129 = vmatpush.msra.mxu0 0.0
        %1130 = vmatpush.msra.mxu0 0.0
        %1131 = vmatpush.msra.mxu0 0.0
        %1132 = vmatpush.msra.mxu0 %v691
        %1133 = vmatmul.f32.gmra.mxu0 %v1106
        %v1134 = vpop.f32.mrf.mxu0
        %v1135 = vadd.f32 0.0, %v1134
        %1136 = vmatmul.f32.gmra.mxu0 %v1109
        %v1137 = vpop.f32.mrf.mxu0
        %v1138 = vadd.f32 0.0, %v1137
        %1139 = vmatmul.f32.gmra.mxu0 %v1112
        %v1140 = vpop.f32.mrf.mxu0
        %v1141 = vadd.f32 0.0, %v1140
        %1142 = vmatmul.f32.gmra.mxu0 %v1115
        %v1143 = vpop.f32.mrf.mxu0
        %v1144 = vadd.f32 0.0, %v1143
        %1145 = vdwg.mxu0
        %v1146 = vadd.f32 %v1089, %v1135
        %v1147 = vadd.f32 %v1092, %v1138
        %v1148 = vadd.f32 %v1095, %v1141
        %v1149 = vadd.f32 %v1098, %v1144
        %s1150 = scalar_lea.vmem %s6, 64
        %v1151 = vld [vmem:[%s1150] sm:$0xff]
        %v1152 = vld [vmem:[%s1150 + $0x8] sm:$0xff]
        %v1153 = vld [vmem:[%s1150 + $0x10] sm:$0xff]
        %v1154 = vld [vmem:[%s1150 + $0x18] sm:$0xff]
        %v1156 = vsel %vm489, %v1151, 0
        %v1159 = vsel %vm489, %v1152, 0
        %v1162 = vsel %vm489, %v1153, 0
        %v1165 = vsel %vm489, %v1154, 0
        %1167 = vmatpush.msra.mxu0 0.0
        %1168 = vmatpush.msra.mxu0 0.0
        %1169 = vmatpush.msra.mxu0 0.0
        %1170 = vmatpush.msra.mxu0 0.0
        %1171 = vmatpush.msra.mxu0 0.0
        %1172 = vmatpush.msra.mxu0 0.0
        %1173 = vmatpush.msra.mxu0 0.0
        %1174 = vmatpush.msra.mxu0 0.0
        %1175 = vmatpush.msra.mxu0 0.0
        %1176 = vmatpush.msra.mxu0 0.0
        %1177 = vmatpush.msra.mxu0 0.0
        %1178 = vmatpush.msra.mxu0 0.0
        %1179 = vmatpush.msra.mxu0 0.0
        %1180 = vmatpush.msra.mxu0 0.0
        %1181 = vmatpush.msra.mxu0 0.0
        %1182 = vmatpush.msra.mxu0 %v999
        %1183 = vmatmul.f32.gmra.mxu0 %v1156
        %v1184 = vpop.f32.mrf.mxu0
        %v1185 = vadd.f32 0.0, %v1184
        %1186 = vmatmul.f32.gmra.mxu0 %v1159
        %v1187 = vpop.f32.mrf.mxu0
        %v1188 = vadd.f32 0.0, %v1187
        %1189 = vmatmul.f32.gmra.mxu0 %v1162
        %v1190 = vpop.f32.mrf.mxu0
        %v1191 = vadd.f32 0.0, %v1190
        %1192 = vmatmul.f32.gmra.mxu0 %v1165
        %v1193 = vpop.f32.mrf.mxu0
        %v1194 = vadd.f32 0.0, %v1193
        %1195 = vdwg.mxu0
        %v1196 = vadd.f32 %v1146, %v1185
        %v1197 = vadd.f32 %v1147, %v1188
        %v1198 = vadd.f32 %v1148, %v1191
        %v1199 = vadd.f32 %v1149, %v1194
        %s1200 = scalar_lea.vmem %s7, 64
        %v1201 = vld [vmem:[%s1200] sm:$0xff]
        %v1202 = vld [vmem:[%s1200 + $0x8] sm:$0xff]
        %v1203 = vld [vmem:[%s1200 + $0x10] sm:$0xff]
        %v1204 = vld [vmem:[%s1200 + $0x18] sm:$0xff]
        %1206 = vset.pattern.permute.xlu0 0
        %1207 = vperm.xlu0 %1206, %v1201
        %v1208 = vpop.permute.xlu0 %1207
        %1211 = vset.pattern.permute.xlu0 0
        %1212 = vperm.xlu0 %1211, %v1202
        %v1213 = vpop.permute.xlu0 %1212
        %1216 = vset.pattern.permute.xlu0 0
        %1217 = vperm.xlu0 %1216, %v1203
        %v1218 = vpop.permute.xlu0 %1217
        %1221 = vset.pattern.permute.xlu0 0
        %1222 = vperm.xlu0 %1221, %v1204
        %v1223 = vpop.permute.xlu0 %1222
        %v1225 = vadd.f32 %v1196, %v1208
        %v1226 = vadd.f32 %v1197, %v1213
        %v1227 = vadd.f32 %v1198, %v1218
        %v1228 = vadd.f32 %v1199, %v1223
        %v1229 = vmax.f32 %v1225, 0.0
        %v1230 = vmax.f32 %v1226, 0.0
        %v1231 = vmax.f32 %v1227, 0.0
        %v1232 = vmax.f32 %v1228, 0.0
        %s1233 = scalar_lea.vmem %s8, 64
        %v1234 = vld [vmem:[%s1233] sm:$0xff]
        %v1235 = vld [vmem:[%s1233 + $0x8] sm:$0xff]
        %v1236 = vld [vmem:[%s1233 + $0x10] sm:$0xff]
        %v1237 = vld [vmem:[%s1233 + $0x18] sm:$0xff]
        %s1238 = scalar_lea.vmem %s9, 64
        %v1239 = vld [vmem:[%s1238] sm:$0xff]
        %v1240 = vld [vmem:[%s1238 + $0x8] sm:$0xff]
        %v1241 = vld [vmem:[%s1238 + $0x10] sm:$0xff]
        %v1242 = vld [vmem:[%s1238 + $0x18] sm:$0xff]
        %1244 = vset.pattern.permute.xlu0 0
        %1245 = vperm.xlu0 %1244, %v1239
        %v1246 = vpop.permute.xlu0 %1245
        %1249 = vset.pattern.permute.xlu0 0
        %1250 = vperm.xlu0 %1249, %v1240
        %v1251 = vpop.permute.xlu0 %1250
        %1254 = vset.pattern.permute.xlu0 0
        %1255 = vperm.xlu0 %1254, %v1241
        %v1256 = vpop.permute.xlu0 %1255
        %1259 = vset.pattern.permute.xlu0 0
        %1260 = vperm.xlu0 %1259, %v1242
        %v1261 = vpop.permute.xlu0 %1260
        %v1264 = vsel %vm644, %v1234, 0
        %v1267 = vsel %vm644, %v1235, 0
        %v1270 = vsel %vm644, %v1236, 0
        %v1273 = vsel %vm644, %v1237, 0
        %1275 = vmatpush.msra.mxu0 0.0
        %1276 = vmatpush.msra.mxu0 0.0
        %1277 = vmatpush.msra.mxu0 0.0
        %1278 = vmatpush.msra.mxu0 0.0
        %1279 = vmatpush.msra.mxu0 0.0
        %1280 = vmatpush.msra.mxu0 0.0
        %1281 = vmatpush.msra.mxu0 0.0
        %1282 = vmatpush.msra.mxu0 0.0
        %1283 = vmatpush.msra.mxu0 0.0
        %1284 = vmatpush.msra.mxu0 0.0
        %1285 = vmatpush.msra.mxu0 0.0
        %1286 = vmatpush.msra.mxu0 0.0
        %1287 = vmatpush.msra.mxu0 %v1232
        %1288 = vmatpush.msra.mxu0 %v1231
        %1289 = vmatpush.msra.mxu0 %v1230
        %1290 = vmatpush.msra.mxu0 %v1229
        %1291 = vmatmul.f32.gmra.mxu0 %v1264
        %v1292 = vpop.f32.mrf.mxu0
        %v1293 = vadd.f32 %v1246, %v1292
        %1294 = vmatmul.f32.gmra.mxu0 %v1267
        %v1295 = vpop.f32.mrf.mxu0
        %v1296 = vadd.f32 %v1251, %v1295
        %1297 = vmatmul.f32.gmra.mxu0 %v1270
        %v1298 = vpop.f32.mrf.mxu0
        %v1299 = vadd.f32 %v1256, %v1298
        %1300 = vmatmul.f32.gmra.mxu0 %v1273
        %v1301 = vpop.f32.mrf.mxu0
        %v1302 = vadd.f32 %v1261, %v1301
        %1303 = vdwg.mxu0
        %v1304 = vmax.f32 %v1293, 0.0
        %v1305 = vmax.f32 %v1296, 0.0
        %v1306 = vmax.f32 %v1299, 0.0
        %v1307 = vmax.f32 %v1302, 0.0
        %v1308 = vld [vmem:[%s10] sm:$0xff]
        %v1309 = vmax.f32 %v1304, 0.0
        %v1310 = vmax.f32 %v1305, 0.0
        %v1311 = vmax.f32 %v1306, 0.0
        %v1312 = vmax.f32 %v1307, 0.0
        %v1313 = vld [vmem:[%s11] sm:$0xff]
        %1315 = vset.pattern.permute.xlu0 0
        %1316 = vperm.xlu0 %1315, %v1313
        %v1317 = vpop.permute.xlu0 %1316
        %v1320 = vsel %vm644, %v1308, 0
        %1322 = vmatpush.msra.mxu0 0.0
        %1323 = vmatpush.msra.mxu0 0.0
        %1324 = vmatpush.msra.mxu0 0.0
        %1325 = vmatpush.msra.mxu0 0.0
        %1326 = vmatpush.msra.mxu0 0.0
        %1327 = vmatpush.msra.mxu0 0.0
        %1328 = vmatpush.msra.mxu0 0.0
        %1329 = vmatpush.msra.mxu0 0.0
        %1330 = vmatpush.msra.mxu0 0.0
        %1331 = vmatpush.msra.mxu0 0.0
        %1332 = vmatpush.msra.mxu0 0.0
        %1333 = vmatpush.msra.mxu0 0.0
        %1334 = vmatpush.msra.mxu0 %v1312
        %1335 = vmatpush.msra.mxu0 %v1311
        %1336 = vmatpush.msra.mxu0 %v1310
        %1337 = vmatpush.msra.mxu0 %v1309
        %1338 = vmatmul.f32.gmra.mxu0 %v1320
        %v1339 = vpop.f32.mrf.mxu0
        %v1340 = vadd.f32 %v1317, %v1339
        %1341 = vdwg.mxu0
        %1342 = vst [vmem:[%s415] sm:$0xff] %v1340
        %s1343 = sand.u32 %s296, 1
        %s1344 = scalar_lea.sflag [#allocation3], %s1343
        %s1345 = sand.u32 %s296, 1
        %s1346 = smul.addr %s1345, 8
        %s1347 = scalar_lea.vmem [#allocation2], %s1346
        // Predicated region
        $region69: #{tpu_custom_call.1} parent=67 // pred_check
          %p1348 = pneg %p306
        $region70: #{tpu_custom_call.1} parent=67 // pred_check_branch
          %1350 = sbr.rel (%p1348) target = $region72
        $region71: #{tpu_custom_call.1} parent=67 // pred_region
          %1352 = vsyncadd %s1344, 0
          %s1353 = smul.addr %s26, 8
          %s1354 = scalar_lea.hbm %s12, %s1353
          %s1356 = sshll.u32 %s1347, 4
          %s1357 = int_to_ptr.vmem [resolvable:$true] %s1356
          %s1358 = sshll.u32 %s1354, 4
          %s1359 = int_to_ptr.hbm [resolvable:$true] %s1358
          %1361 = dma.vmem_to_hbm [thread:$0]  %s1357, 128, %s1359, %s1344
        $region72: #{tpu_custom_call.1} parent=67 // pred_fallthru
          _
      $region68: #{tpu_custom_call.1} parent=5 // pred_fallthru
        _
      %p1362 = scmp.le.s32.totalorder 2, %s21
      // Predicated region
      $region73: #{tpu_custom_call.1} parent=5 // pred_check
        %p1363 = pneg %p1362
      $region74: #{tpu_custom_call.1} parent=5 // pred_check_branch
        %1365 = sbr.rel (%p1363) target = $region76
      $region75: #{tpu_custom_call.1} parent=5 // pred_region
        %s1366 = ssub.s32 %s21, 2
        // Predicated region
        $region77: #{tpu_custom_call.1} parent=75 // pred_check
          %p1367 = pneg %p312
        $region78: #{tpu_custom_call.1} parent=75 // pred_check_branch
          %1369 = sbr.rel (%p1367) target = $region80
        $region79: #{tpu_custom_call.1} parent=75 // pred_region
          %s1370 = sand.u32 %s297, 1
          %s1371 = scalar_lea.sflag [#allocation3], %s1370
          %s1372 = sand.u32 %s297, 1
          %s1373 = smul.addr %s1372, 8
          %s1374 = scalar_lea.vmem [#allocation2], %s1373
          %1376 = dma.done %s1371, 128
        $region80: #{tpu_custom_call.1} parent=75 // pred_fallthru
          _
      $region76: #{tpu_custom_call.1} parent=5 // pred_fallthru
        _
    $region6: #{tpu_custom_call.1} parent=1 // loop_footer
      %s25 = sadd.s32 1, %s21
    $region7: #{tpu_custom_call.1} parent=1 // loop_footer_branch
      %20 = sbr.rel target = $region3
    $region8: #{tpu_custom_call.1} parent=1 // loop_exit
      _
    %1377 = vsyncpa [#allocation3], 1
    %s1378 = scalar_lea.sflag [#allocation3], 1
    %1379 = vsyncpa %s1378, 1

</llo_original>
